<compile_context>
chip_gen: v7x
topology: tpu7x:2x2x1
jax: 0.10.0
libtpu: 0.0.40
codegen_flags: <defaults>
</compile_context>

<pallas_src>
import jax
import jax.numpy as jnp
from jax.experimental import pallas as pl
from jax.experimental.pallas import tpu as pltpu


def _lstm_kernel(x_ref, wih_ref, whh_ref, bias_ref, out_ref):
    # x_ref:    (b, n*in_dim)   flattened batch-major input (free reshape of (b, n, t, c))
    # wih_ref:  (in_dim, 4H)    input weight, pre-transposed
    # whh_ref:  (H, 4H)         recurrent weight, pre-transposed
    # bias_ref: (1, 4H)         b_ih + b_hh
    # out_ref:  (b, n*H)        node-major hidden outputs, flattened along lanes
    b = x_ref.shape[0]
    in_dim, four_h = wih_ref.shape
    H = four_h // 4
    n = x_ref.shape[1] // in_dim

    wih = wih_ref[...]          # loaded once, resident for the entry dots
    whh = whh_ref[...]          # loaded once, resident across the recurrence
    bias = bias_ref[...]
    xv = x_ref[...]             # whole input (tiny) held as a value in vregs

    # Hoisted input projection: n independent MXU dots, all off the serial h-chain.
    # (Same total FLOPs as one big (n*b, in_dim) dot; per-node form keeps every slice a
    #  static lane slice — no sublane relayout / strided reads anywhere.)
    xw = [
        jnp.dot(xv[:, i * in_dim:(i + 1) * in_dim], wih,
                preferred_element_type=jnp.float32) + bias
        for i in range(n)
    ]

    h = jnp.zeros((b, H), jnp.float32)
    c = jnp.zeros((b, H), jnp.float32)
    hs = []

    # Serial node recurrence (n small & static -> fully unrolled Python loop).
    # NOTE: the tiny (b,H)@(H,4H) MXU dot is latency- not throughput-bound; a VPU
    # broadcast-MAC variant may win on v5e/v6e but needs a bundle-dump measurement.
    for i in range(n):
        gates = xw[i] + jnp.dot(h, whh, preferred_element_type=jnp.float32)  # (b, 4H)

        # Fused nonlinearities: one sigmoid + one tanh over the full (b, 4H) tile,
        # then cheap lane slices (PyTorch LSTMCell gate order: i, f, g, o).
        sig = jax.nn.sigmoid(gates)
        tnh = jnp.tanh(gates)
        i_g = sig[:, 0 * H:1 * H]
        f_g = sig[:, 1 * H:2 * H]
        g_g = tnh[:, 2 * H:3 * H]
        o_g = sig[:, 3 * H:4 * H]

        c = f_g * c + i_g * g_g
        h = o_g * jnp.tanh(c)
        hs.append(h)

    # Single lane-dense store of all node outputs.
    out_ref[...] = jnp.concatenate(hs, axis=1).astype(out_ref.dtype)


def lstm_forward(x, w_ih, w_hh, b_ih, b_hh):
    """x: (b, n, t, c) float32.  Returns (b, n, t) — same as the PyTorch module."""
    b, n, t, c = x.shape
    H = t                       # hidden_size = timesteps_input
    in_dim = t * c              # input_size  = timesteps_input * features

    # Activation-side glue is reshapes only (free, no data movement, no extra HBM pass).
    x2d = x.reshape(b, n * in_dim)
    # Weight-side glue: tiny one-off ops on O(weights) data; XLA fuses them cheaply.
    wih_t = jnp.transpose(w_ih).astype(jnp.float32)       # (in_dim, 4H)
    whh_t = jnp.transpose(w_hh).astype(jnp.float32)       # (H, 4H)
    bias = (b_ih + b_hh).reshape(1, 4 * H).astype(jnp.float32)

    vmem = pltpu.MemorySpace.VMEM
    out = pl.pallas_call(
        _lstm_kernel,
        out_shape=jax.ShapeDtypeStruct((b, n * H), x.dtype),
        in_specs=[
            pl.BlockSpec(memory_space=vmem),    # x2d   (b, n*in_dim)
            pl.BlockSpec(memory_space=vmem),    # W_ih^T (in_dim, 4H)
            pl.BlockSpec(memory_space=vmem),    # W_hh^T (H, 4H)
            pl.BlockSpec(memory_space=vmem),    # bias   (1, 4H)
        ],
        out_specs=pl.BlockSpec(memory_space=vmem),
    )(x2d, wih_t, whh_t, bias)

    return out.reshape(b, n, H)                 # free reshape, row-major compatible


def lstm_reference(x, w_ih, w_hh, b_ih, b_hh):
    """Pure-JAX reference mirroring torch.nn.LSTMCell iterated over nodes."""
    b, n, t, c = x.shape
    H = t
    x_em = jnp.transpose(x.reshape(b, n, t * c), (1, 0, 2))
    h = jnp.zeros((b, H), jnp.float32)
    cs = jnp.zeros((b, H), jnp.float32)
    outs = []
    for i in range(n):
        gates = x_em[i] @ w_ih.T + b_ih + h @ w_hh.T + b_hh
        ig = jax.nn.sigmoid(gates[:, :H])
        fg = jax.nn.sigmoid(gates[:, H:2 * H])
        gg = jnp.tanh(gates[:, 2 * H:3 * H])
        og = jax.nn.sigmoid(gates[:, 3 * H:4 * H])
        cs = fg * cs + ig * gg
        h = og * jnp.tanh(cs)
        outs.append(h)
    return jnp.transpose(jnp.stack(outs, 0), (1, 0, 2))


if __name__ == "__main__":
    # Small shapes implied by the module: batch=8, num_nodes=8, timesteps=8, features=4.
    B, N, T, C = 8, 8, 8, 4
    H = T          # LSTMCell hidden_size = timesteps_input
    IN = T * C     # LSTMCell input_size  = timesteps_input * features

    key = jax.random.PRNGKey(0)
    kx, k1, k2, k3, k4 = jax.random.split(key, 5)
    x = jax.random.normal(kx, (B, N, T, C), jnp.float32)

    # Deterministic parameter init (PyTorch LSTMCell shapes, uniform(-1/sqrt(H), 1/sqrt(H))).
    bound = 1.0 / (H ** 0.5)
    w_ih = jax.random.uniform(k1, (4 * H, IN), jnp.float32, -bound, bound)
    w_hh = jax.random.uniform(k2, (4 * H, H), jnp.float32, -bound, bound)
    b_ih = jax.random.uniform(k3, (4 * H,), jnp.float32, -bound, bound)
    b_hh = jax.random.uniform(k4, (4 * H,), jnp.float32, -bound, bound)

    out = jax.jit(lstm_forward)(x, w_ih, w_hh, b_ih, b_hh)
    out = jax.block_until_ready(out)

    ref = lstm_reference(x, w_ih, w_hh, b_ih, b_hh)
    assert out.shape == (B, N, T), out.shape
    assert jnp.allclose(out, ref, atol=1e-5, rtol=1e-5), "mismatch vs reference"
    print("KERNEL_OK")
</pallas_src>

<mosaic_0001>
module attributes {stable_mosaic.version = 11 : i64} {
  func.func @_lstm_kernel(%arg0: memref<8x256xf32, #tpu.memory_space<vmem>>, %arg1: memref<32x32xf32, #tpu.memory_space<vmem>>, %arg2: memref<8x32xf32, #tpu.memory_space<vmem>>, %arg3: memref<1x32xf32, #tpu.memory_space<vmem>>, %arg4: memref<8x64xf32, #tpu.memory_space<vmem>>) attributes {dimension_semantics = [], scalar_prefetch = 0 : i64, scratch_operands = 0 : i64, tpu.core_type = #tpu.core_type<tc>} {
    %c0 = arith.constant 0 : index
    %c0_0 = arith.constant 0 : index
    %0 = vector.load %arg1[%c0, %c0_0] : memref<32x32xf32, #tpu.memory_space<vmem>>, vector<32x32xf32>
    %c0_1 = arith.constant 0 : index
    %c0_2 = arith.constant 0 : index
    %1 = vector.load %arg2[%c0_1, %c0_2] : memref<8x32xf32, #tpu.memory_space<vmem>>, vector<8x32xf32>
    %c0_3 = arith.constant 0 : index
    %c0_4 = arith.constant 0 : index
    %2 = vector.load %arg3[%c0_3, %c0_4] : memref<1x32xf32, #tpu.memory_space<vmem>>, vector<1x32xf32>
    %c0_5 = arith.constant 0 : index
    %c0_6 = arith.constant 0 : index
    %3 = vector.load %arg0[%c0_5, %c0_6] : memref<8x256xf32, #tpu.memory_space<vmem>>, vector<8x256xf32>
    %4 = vector.extract_strided_slice %3 {offsets = [0, 0], sizes = [8, 32], strides = [1, 1]} : vector<8x256xf32> to vector<8x32xf32>
    %cst = arith.constant dense<0.000000e+00> : vector<8x32xf32>
    %5 = tpu.matmul %4, %0, %cst {dimension_numbers = #tpu.dot_dimension_numbers<[1], [0], [0], [1], [0, 0, 1, 1], [], []>} : vector<8x32xf32>, vector<32x32xf32>, vector<8x32xf32> -> vector<8x32xf32>
    %6 = vector.broadcast %2 : vector<1x32xf32> to vector<8x32xf32>
    %7 = arith.addf %5, %6 : vector<8x32xf32>
    %8 = vector.extract_strided_slice %3 {offsets = [0, 32], sizes = [8, 32], strides = [1, 1]} : vector<8x256xf32> to vector<8x32xf32>
    %cst_7 = arith.constant dense<0.000000e+00> : vector<8x32xf32>
    %9 = tpu.matmul %8, %0, %cst_7 {dimension_numbers = #tpu.dot_dimension_numbers<[1], [0], [0], [1], [0, 0, 1, 1], [], []>} : vector<8x32xf32>, vector<32x32xf32>, vector<8x32xf32> -> vector<8x32xf32>
    %10 = vector.broadcast %2 : vector<1x32xf32> to vector<8x32xf32>
    %11 = arith.addf %9, %10 : vector<8x32xf32>
    %12 = vector.extract_strided_slice %3 {offsets = [0, 64], sizes = [8, 32], strides = [1, 1]} : vector<8x256xf32> to vector<8x32xf32>
    %cst_8 = arith.constant dense<0.000000e+00> : vector<8x32xf32>
    %13 = tpu.matmul %12, %0, %cst_8 {dimension_numbers = #tpu.dot_dimension_numbers<[1], [0], [0], [1], [0, 0, 1, 1], [], []>} : vector<8x32xf32>, vector<32x32xf32>, vector<8x32xf32> -> vector<8x32xf32>
    %14 = vector.broadcast %2 : vector<1x32xf32> to vector<8x32xf32>
    %15 = arith.addf %13, %14 : vector<8x32xf32>
    %16 = vector.extract_strided_slice %3 {offsets = [0, 96], sizes = [8, 32], strides = [1, 1]} : vector<8x256xf32> to vector<8x32xf32>
    %cst_9 = arith.constant dense<0.000000e+00> : vector<8x32xf32>
    %17 = tpu.matmul %16, %0, %cst_9 {dimension_numbers = #tpu.dot_dimension_numbers<[1], [0], [0], [1], [0, 0, 1, 1], [], []>} : vector<8x32xf32>, vector<32x32xf32>, vector<8x32xf32> -> vector<8x32xf32>
    %18 = vector.broadcast %2 : vector<1x32xf32> to vector<8x32xf32>
    %19 = arith.addf %17, %18 : vector<8x32xf32>
    %20 = vector.extract_strided_slice %3 {offsets = [0, 128], sizes = [8, 32], strides = [1, 1]} : vector<8x256xf32> to vector<8x32xf32>
    %cst_10 = arith.constant dense<0.000000e+00> : vector<8x32xf32>
    %21 = tpu.matmul %20, %0, %cst_10 {dimension_numbers = #tpu.dot_dimension_numbers<[1], [0], [0], [1], [0, 0, 1, 1], [], []>} : vector<8x32xf32>, vector<32x32xf32>, vector<8x32xf32> -> vector<8x32xf32>
    %22 = vector.broadcast %2 : vector<1x32xf32> to vector<8x32xf32>
    %23 = arith.addf %21, %22 : vector<8x32xf32>
    %24 = vector.extract_strided_slice %3 {offsets = [0, 160], sizes = [8, 32], strides = [1, 1]} : vector<8x256xf32> to vector<8x32xf32>
    %cst_11 = arith.constant dense<0.000000e+00> : vector<8x32xf32>
    %25 = tpu.matmul %24, %0, %cst_11 {dimension_numbers = #tpu.dot_dimension_numbers<[1], [0], [0], [1], [0, 0, 1, 1], [], []>} : vector<8x32xf32>, vector<32x32xf32>, vector<8x32xf32> -> vector<8x32xf32>
    %26 = vector.broadcast %2 : vector<1x32xf32> to vector<8x32xf32>
    %27 = arith.addf %25, %26 : vector<8x32xf32>
    %28 = vector.extract_strided_slice %3 {offsets = [0, 192], sizes = [8, 32], strides = [1, 1]} : vector<8x256xf32> to vector<8x32xf32>
    %cst_12 = arith.constant dense<0.000000e+00> : vector<8x32xf32>
    %29 = tpu.matmul %28, %0, %cst_12 {dimension_numbers = #tpu.dot_dimension_numbers<[1], [0], [0], [1], [0, 0, 1, 1], [], []>} : vector<8x32xf32>, vector<32x32xf32>, vector<8x32xf32> -> vector<8x32xf32>
    %30 = vector.broadcast %2 : vector<1x32xf32> to vector<8x32xf32>
    %31 = arith.addf %29, %30 : vector<8x32xf32>
    %32 = vector.extract_strided_slice %3 {offsets = [0, 224], sizes = [8, 32], strides = [1, 1]} : vector<8x256xf32> to vector<8x32xf32>
    %cst_13 = arith.constant dense<0.000000e+00> : vector<8x32xf32>
    %33 = tpu.matmul %32, %0, %cst_13 {dimension_numbers = #tpu.dot_dimension_numbers<[1], [0], [0], [1], [0, 0, 1, 1], [], []>} : vector<8x32xf32>, vector<32x32xf32>, vector<8x32xf32> -> vector<8x32xf32>
    %34 = vector.broadcast %2 : vector<1x32xf32> to vector<8x32xf32>
    %35 = arith.addf %33, %34 : vector<8x32xf32>
    %cst_14 = arith.constant 0.000000e+00 : f32
    %36 = vector.broadcast %cst_14 : f32 to vector<8x8xf32>
    %cst_15 = arith.constant 0.000000e+00 : f32
    %37 = vector.broadcast %cst_15 : f32 to vector<8x8xf32>
    %cst_16 = arith.constant dense<0.000000e+00> : vector<8x32xf32>
    %38 = tpu.matmul %36, %1, %cst_16 {dimension_numbers = #tpu.dot_dimension_numbers<[1], [0], [0], [1], [0, 0, 1, 1], [], []>} : vector<8x8xf32>, vector<8x32xf32>, vector<8x32xf32> -> vector<8x32xf32>
    %39 = arith.addf %7, %38 : vector<8x32xf32>
    %40 = arith.negf %39 : vector<8x32xf32>
    %41 = math.exp %40 : vector<8x32xf32>
    %cst_17 = arith.constant 1.000000e+00 : f32
    %42 = vector.broadcast %cst_17 : f32 to vector<8x32xf32>
    %43 = arith.addf %42, %41 : vector<8x32xf32>
    %44 = arith.divf %42, %43 : vector<8x32xf32>
    %45 = math.tanh %39 : vector<8x32xf32>
    %46 = vector.extract_strided_slice %44 {offsets = [0, 0], sizes = [8, 8], strides = [1, 1]} : vector<8x32xf32> to vector<8x8xf32>
    %47 = vector.extract_strided_slice %44 {offsets = [0, 8], sizes = [8, 8], strides = [1, 1]} : vector<8x32xf32> to vector<8x8xf32>
    %48 = vector.extract_strided_slice %45 {offsets = [0, 16], sizes = [8, 8], strides = [1, 1]} : vector<8x32xf32> to vector<8x8xf32>
    %49 = vector.extract_strided_slice %44 {offsets = [0, 24], sizes = [8, 8], strides = [1, 1]} : vector<8x32xf32> to vector<8x8xf32>
    %50 = arith.mulf %47, %37 : vector<8x8xf32>
    %51 = arith.mulf %46, %48 : vector<8x8xf32>
    %52 = arith.addf %50, %51 : vector<8x8xf32>
    %53 = math.tanh %52 : vector<8x8xf32>
    %54 = arith.mulf %49, %53 : vector<8x8xf32>
    %cst_18 = arith.constant dense<0.000000e+00> : vector<8x32xf32>
    %55 = tpu.matmul %54, %1, %cst_18 {dimension_numbers = #tpu.dot_dimension_numbers<[1], [0], [0], [1], [0, 0, 1, 1], [], []>} : vector<8x8xf32>, vector<8x32xf32>, vector<8x32xf32> -> vector<8x32xf32>
    %56 = arith.addf %11, %55 : vector<8x32xf32>
    %57 = arith.negf %56 : vector<8x32xf32>
    %58 = math.exp %57 : vector<8x32xf32>
    %cst_19 = arith.constant 1.000000e+00 : f32
    %59 = vector.broadcast %cst_19 : f32 to vector<8x32xf32>
    %60 = arith.addf %59, %58 : vector<8x32xf32>
    %61 = arith.divf %59, %60 : vector<8x32xf32>
    %62 = math.tanh %56 : vector<8x32xf32>
    %63 = vector.extract_strided_slice %61 {offsets = [0, 0], sizes = [8, 8], strides = [1, 1]} : vector<8x32xf32> to vector<8x8xf32>
    %64 = vector.extract_strided_slice %61 {offsets = [0, 8], sizes = [8, 8], strides = [1, 1]} : vector<8x32xf32> to vector<8x8xf32>
    %65 = vector.extract_strided_slice %62 {offsets = [0, 16], sizes = [8, 8], strides = [1, 1]} : vector<8x32xf32> to vector<8x8xf32>
    %66 = vector.extract_strided_slice %61 {offsets = [0, 24], sizes = [8, 8], strides = [1, 1]} : vector<8x32xf32> to vector<8x8xf32>
    %67 = arith.mulf %64, %52 : vector<8x8xf32>
    %68 = arith.mulf %63, %65 : vector<8x8xf32>
    %69 = arith.addf %67, %68 : vector<8x8xf32>
    %70 = math.tanh %69 : vector<8x8xf32>
    %71 = arith.mulf %66, %70 : vector<8x8xf32>
    %cst_20 = arith.constant dense<0.000000e+00> : vector<8x32xf32>
    %72 = tpu.matmul %71, %1, %cst_20 {dimension_numbers = #tpu.dot_dimension_numbers<[1], [0], [0], [1], [0, 0, 1, 1], [], []>} : vector<8x8xf32>, vector<8x32xf32>, vector<8x32xf32> -> vector<8x32xf32>
    %73 = arith.addf %15, %72 : vector<8x32xf32>
    %74 = arith.negf %73 : vector<8x32xf32>
    %75 = math.exp %74 : vector<8x32xf32>
    %cst_21 = arith.constant 1.000000e+00 : f32
    %76 = vector.broadcast %cst_21 : f32 to vector<8x32xf32>
    %77 = arith.addf %76, %75 : vector<8x32xf32>
    %78 = arith.divf %76, %77 : vector<8x32xf32>
    %79 = math.tanh %73 : vector<8x32xf32>
    %80 = vector.extract_strided_slice %78 {offsets = [0, 0], sizes = [8, 8], strides = [1, 1]} : vector<8x32xf32> to vector<8x8xf32>
    %81 = vector.extract_strided_slice %78 {offsets = [0, 8], sizes = [8, 8], strides = [1, 1]} : vector<8x32xf32> to vector<8x8xf32>
    %82 = vector.extract_strided_slice %79 {offsets = [0, 16], sizes = [8, 8], strides = [1, 1]} : vector<8x32xf32> to vector<8x8xf32>
    %83 = vector.extract_strided_slice %78 {offsets = [0, 24], sizes = [8, 8], strides = [1, 1]} : vector<8x32xf32> to vector<8x8xf32>
    %84 = arith.mulf %81, %69 : vector<8x8xf32>
    %85 = arith.mulf %80, %82 : vector<8x8xf32>
    %86 = arith.addf %84, %85 : vector<8x8xf32>
    %87 = math.tanh %86 : vector<8x8xf32>
    %88 = arith.mulf %83, %87 : vector<8x8xf32>
    %cst_22 = arith.constant dense<0.000000e+00> : vector<8x32xf32>
    %89 = tpu.matmul %88, %1, %cst_22 {dimension_numbers = #tpu.dot_dimension_numbers<[1], [0], [0], [1], [0, 0, 1, 1], [], []>} : vector<8x8xf32>, vector<8x32xf32>, vector<8x32xf32> -> vector<8x32xf32>
    %90 = arith.addf %19, %89 : vector<8x32xf32>
    %91 = arith.negf %90 : vector<8x32xf32>
    %92 = math.exp %91 : vector<8x32xf32>
    %cst_23 = arith.constant 1.000000e+00 : f32
    %93 = vector.broadcast %cst_23 : f32 to vector<8x32xf32>
    %94 = arith.addf %93, %92 : vector<8x32xf32>
    %95 = arith.divf %93, %94 : vector<8x32xf32>
    %96 = math.tanh %90 : vector<8x32xf32>
    %97 = vector.extract_strided_slice %95 {offsets = [0, 0], sizes = [8, 8], strides = [1, 1]} : vector<8x32xf32> to vector<8x8xf32>
    %98 = vector.extract_strided_slice %95 {offsets = [0, 8], sizes = [8, 8], strides = [1, 1]} : vector<8x32xf32> to vector<8x8xf32>
    %99 = vector.extract_strided_slice %96 {offsets = [0, 16], sizes = [8, 8], strides = [1, 1]} : vector<8x32xf32> to vector<8x8xf32>
    %100 = vector.extract_strided_slice %95 {offsets = [0, 24], sizes = [8, 8], strides = [1, 1]} : vector<8x32xf32> to vector<8x8xf32>
    %101 = arith.mulf %98, %86 : vector<8x8xf32>
    %102 = arith.mulf %97, %99 : vector<8x8xf32>
    %103 = arith.addf %101, %102 : vector<8x8xf32>
    %104 = math.tanh %103 : vector<8x8xf32>
    %105 = arith.mulf %100, %104 : vector<8x8xf32>
    %cst_24 = arith.constant dense<0.000000e+00> : vector<8x32xf32>
    %106 = tpu.matmul %105, %1, %cst_24 {dimension_numbers = #tpu.dot_dimension_numbers<[1], [0], [0], [1], [0, 0, 1, 1], [], []>} : vector<8x8xf32>, vector<8x32xf32>, vector<8x32xf32> -> vector<8x32xf32>
    %107 = arith.addf %23, %106 : vector<8x32xf32>
    %108 = arith.negf %107 : vector<8x32xf32>
    %109 = math.exp %108 : vector<8x32xf32>
    %cst_25 = arith.constant 1.000000e+00 : f32
    %110 = vector.broadcast %cst_25 : f32 to vector<8x32xf32>
    %111 = arith.addf %110, %109 : vector<8x32xf32>
    %112 = arith.divf %110, %111 : vector<8x32xf32>
    %113 = math.tanh %107 : vector<8x32xf32>
    %114 = vector.extract_strided_slice %112 {offsets = [0, 0], sizes = [8, 8], strides = [1, 1]} : vector<8x32xf32> to vector<8x8xf32>
    %115 = vector.extract_strided_slice %112 {offsets = [0, 8], sizes = [8, 8], strides = [1, 1]} : vector<8x32xf32> to vector<8x8xf32>
    %116 = vector.extract_strided_slice %113 {offsets = [0, 16], sizes = [8, 8], strides = [1, 1]} : vector<8x32xf32> to vector<8x8xf32>
    %117 = vector.extract_strided_slice %112 {offsets = [0, 24], sizes = [8, 8], strides = [1, 1]} : vector<8x32xf32> to vector<8x8xf32>
    %118 = arith.mulf %115, %103 : vector<8x8xf32>
    %119 = arith.mulf %114, %116 : vector<8x8xf32>
    %120 = arith.addf %118, %119 : vector<8x8xf32>
    %121 = math.tanh %120 : vector<8x8xf32>
    %122 = arith.mulf %117, %121 : vector<8x8xf32>
    %cst_26 = arith.constant dense<0.000000e+00> : vector<8x32xf32>
    %123 = tpu.matmul %122, %1, %cst_26 {dimension_numbers = #tpu.dot_dimension_numbers<[1], [0], [0], [1], [0, 0, 1, 1], [], []>} : vector<8x8xf32>, vector<8x32xf32>, vector<8x32xf32> -> vector<8x32xf32>
    %124 = arith.addf %27, %123 : vector<8x32xf32>
    %125 = arith.negf %124 : vector<8x32xf32>
    %126 = math.exp %125 : vector<8x32xf32>
    %cst_27 = arith.constant 1.000000e+00 : f32
    %127 = vector.broadcast %cst_27 : f32 to vector<8x32xf32>
    %128 = arith.addf %127, %126 : vector<8x32xf32>
    %129 = arith.divf %127, %128 : vector<8x32xf32>
    %130 = math.tanh %124 : vector<8x32xf32>
    %131 = vector.extract_strided_slice %129 {offsets = [0, 0], sizes = [8, 8], strides = [1, 1]} : vector<8x32xf32> to vector<8x8xf32>
    %132 = vector.extract_strided_slice %129 {offsets = [0, 8], sizes = [8, 8], strides = [1, 1]} : vector<8x32xf32> to vector<8x8xf32>
    %133 = vector.extract_strided_slice %130 {offsets = [0, 16], sizes = [8, 8], strides = [1, 1]} : vector<8x32xf32> to vector<8x8xf32>
    %134 = vector.extract_strided_slice %129 {offsets = [0, 24], sizes = [8, 8], strides = [1, 1]} : vector<8x32xf32> to vector<8x8xf32>
    %135 = arith.mulf %132, %120 : vector<8x8xf32>
    %136 = arith.mulf %131, %133 : vector<8x8xf32>
    %137 = arith.addf %135, %136 : vector<8x8xf32>
    %138 = math.tanh %137 : vector<8x8xf32>
    %139 = arith.mulf %134, %138 : vector<8x8xf32>
    %cst_28 = arith.constant dense<0.000000e+00> : vector<8x32xf32>
    %140 = tpu.matmul %139, %1, %cst_28 {dimension_numbers = #tpu.dot_dimension_numbers<[1], [0], [0], [1], [0, 0, 1, 1], [], []>} : vector<8x8xf32>, vector<8x32xf32>, vector<8x32xf32> -> vector<8x32xf32>
    %141 = arith.addf %31, %140 : vector<8x32xf32>
    %142 = arith.negf %141 : vector<8x32xf32>
    %143 = math.exp %142 : vector<8x32xf32>
    %cst_29 = arith.constant 1.000000e+00 : f32
    %144 = vector.broadcast %cst_29 : f32 to vector<8x32xf32>
    %145 = arith.addf %144, %143 : vector<8x32xf32>
    %146 = arith.divf %144, %145 : vector<8x32xf32>
    %147 = math.tanh %141 : vector<8x32xf32>
    %148 = vector.extract_strided_slice %146 {offsets = [0, 0], sizes = [8, 8], strides = [1, 1]} : vector<8x32xf32> to vector<8x8xf32>
    %149 = vector.extract_strided_slice %146 {offsets = [0, 8], sizes = [8, 8], strides = [1, 1]} : vector<8x32xf32> to vector<8x8xf32>
    %150 = vector.extract_strided_slice %147 {offsets = [0, 16], sizes = [8, 8], strides = [1, 1]} : vector<8x32xf32> to vector<8x8xf32>
    %151 = vector.extract_strided_slice %146 {offsets = [0, 24], sizes = [8, 8], strides = [1, 1]} : vector<8x32xf32> to vector<8x8xf32>
    %152 = arith.mulf %149, %137 : vector<8x8xf32>
    %153 = arith.mulf %148, %150 : vector<8x8xf32>
    %154 = arith.addf %152, %153 : vector<8x8xf32>
    %155 = math.tanh %154 : vector<8x8xf32>
    %156 = arith.mulf %151, %155 : vector<8x8xf32>
    %cst_30 = arith.constant dense<0.000000e+00> : vector<8x32xf32>
    %157 = tpu.matmul %156, %1, %cst_30 {dimension_numbers = #tpu.dot_dimension_numbers<[1], [0], [0], [1], [0, 0, 1, 1], [], []>} : vector<8x8xf32>, vector<8x32xf32>, vector<8x32xf32> -> vector<8x32xf32>
    %158 = arith.addf %35, %157 : vector<8x32xf32>
    %159 = arith.negf %158 : vector<8x32xf32>
    %160 = math.exp %159 : vector<8x32xf32>
    %cst_31 = arith.constant 1.000000e+00 : f32
    %161 = vector.broadcast %cst_31 : f32 to vector<8x32xf32>
    %162 = arith.addf %161, %160 : vector<8x32xf32>
    %163 = arith.divf %161, %162 : vector<8x32xf32>
    %164 = math.tanh %158 : vector<8x32xf32>
    %165 = vector.extract_strided_slice %163 {offsets = [0, 0], sizes = [8, 8], strides = [1, 1]} : vector<8x32xf32> to vector<8x8xf32>
    %166 = vector.extract_strided_slice %163 {offsets = [0, 8], sizes = [8, 8], strides = [1, 1]} : vector<8x32xf32> to vector<8x8xf32>
    %167 = vector.extract_strided_slice %164 {offsets = [0, 16], sizes = [8, 8], strides = [1, 1]} : vector<8x32xf32> to vector<8x8xf32>
    %168 = vector.extract_strided_slice %163 {offsets = [0, 24], sizes = [8, 8], strides = [1, 1]} : vector<8x32xf32> to vector<8x8xf32>
    %169 = arith.mulf %166, %154 : vector<8x8xf32>
    %170 = arith.mulf %165, %167 : vector<8x8xf32>
    %171 = arith.addf %169, %170 : vector<8x8xf32>
    %172 = math.tanh %171 : vector<8x8xf32>
    %173 = arith.mulf %168, %172 : vector<8x8xf32>
    %174 = tpu.concatenate %54, %71, %88, %105, %122, %139, %156, %173 in 1 : vector<8x8xf32>, vector<8x8xf32>, vector<8x8xf32>, vector<8x8xf32>, vector<8x8xf32>, vector<8x8xf32>, vector<8x8xf32>, vector<8x8xf32> -> vector<8x64xf32>
    %c0_32 = arith.constant 0 : index
    %c0_33 = arith.constant 0 : index
    %175 = vector.load %arg4[%c0_32, %c0_33] : memref<8x64xf32, #tpu.memory_space<vmem>>, vector<8x64xf32>
    tpu.vector_store %arg4[%c0_32, %c0_33], %174 {strides = array<i32>} : memref<8x64xf32, #tpu.memory_space<vmem>>, vector<8x64xf32>,
    return
  }
}

</mosaic_0001>

<llo_original>
// kernel: lstm_forward.1
$region0: #{lstm_forward.1}
  #allocation0 [shape = 'u32[]', space=smem, size = 0x4, offset = 0x4, fixed_abs, tag = 'smem constant byte address 0x4 - core index']
  #allocation1 [shape = 'u32[144,128]{1,0:T(1,128)}', space=vmem, size = 0x12000, scoped, tag = 'internal scratch']
  %s0 = inlined_call_operand.vmem [shape: f32[8,256], index: 0, kind: input, shape index: {}]
  %s1 = inlined_call_operand.vmem [shape: f32[32,32], index: 1, kind: input, shape index: {}]
  %s2 = inlined_call_operand.vmem [shape: f32[8,32], index: 2, kind: input, shape index: {}]
  %s3 = inlined_call_operand.vmem [shape: f32[1,32], index: 3, kind: input, shape index: {}]
  %s4 = inlined_call_operand.vmem [shape: f32[8,64], index: 4, kind: output, shape index: {}]
  %s5 = sld [smem:[#allocation0]]
  $region26: #{lstm_forward.1} parent=0
    _
  %s7 = ssub.s32 1, %s5
  %s8 = scalar_select 0, %s7, %s5
  // Predicated region
  $region2: #{lstm_forward.1} parent=0 // pred_check
    _
  $region3: #{lstm_forward.1} parent=0 // pred_check_branch
    %10 = sbr.rel (0) target = $region5
  $region4: #{lstm_forward.1} parent=0 // pred_region
    _
  $region5: #{lstm_forward.1} parent=0 // pred_fallthru
    _
  // Predicated region
  $region6: #{lstm_forward.1} parent=0 // pred_check
    _
  $region7: #{lstm_forward.1} parent=0 // pred_check_branch
    %12 = sbr.rel (0) target = $region9
  $region8: #{lstm_forward.1} parent=0 // pred_region
    _
  $region9: #{lstm_forward.1} parent=0 // pred_fallthru
    _
  // Predicated region
  $region10: #{lstm_forward.1} parent=0 // pred_check
    _
  $region11: #{lstm_forward.1} parent=0 // pred_check_branch
    %14 = sbr.rel (0) target = $region13
  $region12: #{lstm_forward.1} parent=0 // pred_region
    _
  $region13: #{lstm_forward.1} parent=0 // pred_fallthru
    _
  // Predicated region
  $region14: #{lstm_forward.1} parent=0 // pred_check
    _
  $region15: #{lstm_forward.1} parent=0 // pred_check_branch
    %16 = sbr.rel (0) target = $region17
  $region16: #{lstm_forward.1} parent=0 // pred_region
    _
  $region17: #{lstm_forward.1} parent=0 // pred_fallthru
    _
  %v17 = vld [vmem:[%s1] sm:$0xff]
  %v18 = vld [vmem:[%s1 + $0x8] sm:$0xff]
  %v19 = vld [vmem:[%s1 + $0x10] sm:$0xff]
  %v20 = vld [vmem:[%s1 + $0x18] sm:$0xff]
  %v21 = vld [vmem:[%s2] sm:$0xff]
  %v22 = vld [vmem:[%s3] sm:$0x1]
  %v23 = vld [vmem:[%s0] sm:$0xff]
  %v24 = vld [vmem:[%s0 + $0x8] sm:$0xff]
  %v26 = vlaneseq
  %v27 = vshrl.u32 %v26, 7
  %v28 = vsub.s32 0, %v27
  %v29 = vrot.slane %v22, %v28
  %vm31 = vcmask 261120
  %v33 = vsel %vm31, %v23, 0
  %35 = vmatprep.subr.mxu0 0.0
  %36 = vmatpush1.msra.mxu0 %v17
  %37 = vmatprep.subr.mxu0 0.0
  %38 = vmatpush1.msra.mxu0 %v18
  %39 = vmatprep.subr.mxu0 0.0
  %40 = vmatpush1.msra.mxu0 %v19
  %41 = vmatprep.subr.mxu0 0.0
  %42 = vmatpush1.msra.mxu0 %v20
  %43 = vmatprep.subr.mxu0 0.0
  %44 = vmatpush1.msra.mxu0 0.0
  %45 = vmatprep.subr.mxu0 0.0
  %46 = vmatpush1.msra.mxu0 0.0
  %47 = vmatprep.subr.mxu0 0.0
  %48 = vmatpush1.msra.mxu0 0.0
  %49 = vmatprep.subr.mxu0 0.0
  %50 = vmatpush1.msra.mxu0 0.0
  %51 = vmatprep.subr.mxu0 0.0
  %52 = vmatpush1.msra.mxu0 0.0
  %53 = vmatprep.subr.mxu0 0.0
  %54 = vmatpush1.msra.mxu0 0.0
  %55 = vmatprep.subr.mxu0 0.0
  %56 = vmatpush1.msra.mxu0 0.0
  %57 = vmatprep.subr.mxu0 0.0
  %58 = vmatpush1.msra.mxu0 0.0
  %59 = vmatprep.subr.mxu0 0.0
  %60 = vmatpush1.msra.mxu0 0.0
  %61 = vmatprep.subr.mxu0 0.0
  %62 = vmatpush1.msra.mxu0 0.0
  %63 = vmatprep.subr.mxu0 0.0
  %64 = vmatpush1.msra.mxu0 0.0
  %65 = vmatprep.subr.mxu0 0.0
  %66 = vmatpush1.msra.mxu0 0.0
  %67 = vmatprep.subr.mxu0 0.0
  %68 = vmatpush1.msra.mxu0 0.0
  %69 = vmatprep.subr.mxu0 0.0
  %70 = vmatpush1.msra.mxu0 0.0
  %71 = vmatprep.subr.mxu0 0.0
  %72 = vmatpush1.msra.mxu0 0.0
  %73 = vmatprep.subr.mxu0 0.0
  %74 = vmatpush1.msra.mxu0 0.0
  %75 = vmatprep.subr.mxu0 0.0
  %76 = vmatpush1.msra.mxu0 0.0
  %77 = vmatprep.subr.mxu0 0.0
  %78 = vmatpush1.msra.mxu0 0.0
  %79 = vmatprep.subr.mxu0 0.0
  %80 = vmatpush1.msra.mxu0 0.0
  %81 = vmatprep.subr.mxu0 0.0
  %82 = vmatpush1.msra.mxu0 0.0
  %83 = vmatprep.subr.mxu0 0.0
  %84 = vmatpush1.msra.mxu0 0.0
  %85 = vmatprep.subr.mxu0 0.0
  %86 = vmatpush1.msra.mxu0 0.0
  %87 = vmatprep.subr.mxu0 0.0
  %88 = vmatpush1.msra.mxu0 0.0
  %89 = vmatprep.subr.mxu0 0.0
  %90 = vmatpush1.msra.mxu0 0.0
  %91 = vmatprep.subr.mxu0 0.0
  %92 = vmatpush1.msra.mxu0 0.0
  %93 = vmatprep.subr.mxu0 0.0
  %94 = vmatpush1.msra.mxu0 0.0
  %95 = vmatprep.subr.mxu0 0.0
  %96 = vmatpush1.msra.mxu0 0.0
  %97 = vmatprep.subr.mxu0 0.0
  %98 = vmatpush1.msra.mxu0 0.0
  %99 = vmatprep.mubr.f32.mxu0 0.0
  %100 = vmatmul.mubr.f32.gmra.mrb[0].mxu0 %v33
  %v101 = vpop.f32.mrb[0].mxu0
  %v102 = vadd.f32 %v29, %v101
  %v103 = vpop.f32.mrb[0].mxu0
  %104 = vdwg.mxu0
  %105 = vrot.lane.b32.xlu0 %v23, 96
  %v106 = vpop.permute.xlu0 %105
  %v107 = vsel %vm31, %v106, 0
  %109 = vmatprep.subr.mxu0 0.0
  %110 = vmatpush1.msra.mxu0 %v17
  %111 = vmatprep.subr.mxu0 0.0
  %112 = vmatpush1.msra.mxu0 %v18
  %113 = vmatprep.subr.mxu0 0.0
  %114 = vmatpush1.msra.mxu0 %v19
  %115 = vmatprep.subr.mxu0 0.0
  %116 = vmatpush1.msra.mxu0 %v20
  %117 = vmatprep.subr.mxu0 0.0
  %118 = vmatpush1.msra.mxu0 0.0
  %119 = vmatprep.subr.mxu0 0.0
  %120 = vmatpush1.msra.mxu0 0.0
  %121 = vmatprep.subr.mxu0 0.0
  %122 = vmatpush1.msra.mxu0 0.0
  %123 = vmatprep.subr.mxu0 0.0
  %124 = vmatpush1.msra.mxu0 0.0
  %125 = vmatprep.subr.mxu0 0.0
  %126 = vmatpush1.msra.mxu0 0.0
  %127 = vmatprep.subr.mxu0 0.0
  %128 = vmatpush1.msra.mxu0 0.0
  %129 = vmatprep.subr.mxu0 0.0
  %130 = vmatpush1.msra.mxu0 0.0
  %131 = vmatprep.subr.mxu0 0.0
  %132 = vmatpush1.msra.mxu0 0.0
  %133 = vmatprep.subr.mxu0 0.0
  %134 = vmatpush1.msra.mxu0 0.0
  %135 = vmatprep.subr.mxu0 0.0
  %136 = vmatpush1.msra.mxu0 0.0
  %137 = vmatprep.subr.mxu0 0.0
  %138 = vmatpush1.msra.mxu0 0.0
  %139 = vmatprep.subr.mxu0 0.0
  %140 = vmatpush1.msra.mxu0 0.0
  %141 = vmatprep.subr.mxu0 0.0
  %142 = vmatpush1.msra.mxu0 0.0
  %143 = vmatprep.subr.mxu0 0.0
  %144 = vmatpush1.msra.mxu0 0.0
  %145 = vmatprep.subr.mxu0 0.0
  %146 = vmatpush1.msra.mxu0 0.0
  %147 = vmatprep.subr.mxu0 0.0
  %148 = vmatpush1.msra.mxu0 0.0
  %149 = vmatprep.subr.mxu0 0.0
  %150 = vmatpush1.msra.mxu0 0.0
  %151 = vmatprep.subr.mxu0 0.0
  %152 = vmatpush1.msra.mxu0 0.0
  %153 = vmatprep.subr.mxu0 0.0
  %154 = vmatpush1.msra.mxu0 0.0
  %155 = vmatprep.subr.mxu0 0.0
  %156 = vmatpush1.msra.mxu0 0.0
  %157 = vmatprep.subr.mxu0 0.0
  %158 = vmatpush1.msra.mxu0 0.0
  %159 = vmatprep.subr.mxu0 0.0
  %160 = vmatpush1.msra.mxu0 0.0
  %161 = vmatprep.subr.mxu0 0.0
  %162 = vmatpush1.msra.mxu0 0.0
  %163 = vmatprep.subr.mxu0 0.0
  %164 = vmatpush1.msra.mxu0 0.0
  %165 = vmatprep.subr.mxu0 0.0
  %166 = vmatpush1.msra.mxu0 0.0
  %167 = vmatprep.subr.mxu0 0.0
  %168 = vmatpush1.msra.mxu0 0.0
  %169 = vmatprep.subr.mxu0 0.0
  %170 = vmatpush1.msra.mxu0 0.0
  %171 = vmatprep.subr.mxu0 0.0
  %172 = vmatpush1.msra.mxu0 0.0
  %173 = vmatprep.mubr.f32.mxu0 0.0
  %174 = vmatmul.mubr.f32.gmra.mrb[0].mxu0 %v107
  %v175 = vpop.f32.mrb[0].mxu0
  %v176 = vadd.f32 %v29, %v175
  %v177 = vpop.f32.mrb[0].mxu0
  %178 = vdwg.mxu0
  %179 = vrot.lane.b32.xlu0 %v23, 64
  %v180 = vpop.permute.xlu0 %179
  %v181 = vsel %vm31, %v180, 0
  %183 = vmatprep.subr.mxu0 0.0
  %184 = vmatpush1.msra.mxu0 %v17
  %185 = vmatprep.subr.mxu0 0.0
  %186 = vmatpush1.msra.mxu0 %v18
  %187 = vmatprep.subr.mxu0 0.0
  %188 = vmatpush1.msra.mxu0 %v19
  %189 = vmatprep.subr.mxu0 0.0
  %190 = vmatpush1.msra.mxu0 %v20
  %191 = vmatprep.subr.mxu0 0.0
  %192 = vmatpush1.msra.mxu0 0.0
  %193 = vmatprep.subr.mxu0 0.0
  %194 = vmatpush1.msra.mxu0 0.0
  %195 = vmatprep.subr.mxu0 0.0
  %196 = vmatpush1.msra.mxu0 0.0
  %197 = vmatprep.subr.mxu0 0.0
  %198 = vmatpush1.msra.mxu0 0.0
  %199 = vmatprep.subr.mxu0 0.0
  %200 = vmatpush1.msra.mxu0 0.0
  %201 = vmatprep.subr.mxu0 0.0
  %202 = vmatpush1.msra.mxu0 0.0
  %203 = vmatprep.subr.mxu0 0.0
  %204 = vmatpush1.msra.mxu0 0.0
  %205 = vmatprep.subr.mxu0 0.0
  %206 = vmatpush1.msra.mxu0 0.0
  %207 = vmatprep.subr.mxu0 0.0
  %208 = vmatpush1.msra.mxu0 0.0
  %209 = vmatprep.subr.mxu0 0.0
  %210 = vmatpush1.msra.mxu0 0.0
  %211 = vmatprep.subr.mxu0 0.0
  %212 = vmatpush1.msra.mxu0 0.0
  %213 = vmatprep.subr.mxu0 0.0
  %214 = vmatpush1.msra.mxu0 0.0
  %215 = vmatprep.subr.mxu0 0.0
  %216 = vmatpush1.msra.mxu0 0.0
  %217 = vmatprep.subr.mxu0 0.0
  %218 = vmatpush1.msra.mxu0 0.0
  %219 = vmatprep.subr.mxu0 0.0
  %220 = vmatpush1.msra.mxu0 0.0
  %221 = vmatprep.subr.mxu0 0.0
  %222 = vmatpush1.msra.mxu0 0.0
  %223 = vmatprep.subr.mxu0 0.0
  %224 = vmatpush1.msra.mxu0 0.0
  %225 = vmatprep.subr.mxu0 0.0
  %226 = vmatpush1.msra.mxu0 0.0
  %227 = vmatprep.subr.mxu0 0.0
  %228 = vmatpush1.msra.mxu0 0.0
  %229 = vmatprep.subr.mxu0 0.0
  %230 = vmatpush1.msra.mxu0 0.0
  %231 = vmatprep.subr.mxu0 0.0
  %232 = vmatpush1.msra.mxu0 0.0
  %233 = vmatprep.subr.mxu0 0.0
  %234 = vmatpush1.msra.mxu0 0.0
  %235 = vmatprep.subr.mxu0 0.0
  %236 = vmatpush1.msra.mxu0 0.0
  %237 = vmatprep.subr.mxu0 0.0
  %238 = vmatpush1.msra.mxu0 0.0
  %239 = vmatprep.subr.mxu0 0.0
  %240 = vmatpush1.msra.mxu0 0.0
  %241 = vmatprep.subr.mxu0 0.0
  %242 = vmatpush1.msra.mxu0 0.0
  %243 = vmatprep.subr.mxu0 0.0
  %244 = vmatpush1.msra.mxu0 0.0
  %245 = vmatprep.subr.mxu0 0.0
  %246 = vmatpush1.msra.mxu0 0.0
  %247 = vmatprep.mubr.f32.mxu0 0.0
  %248 = vmatmul.mubr.f32.gmra.mrb[0].mxu0 %v181
  %v249 = vpop.f32.mrb[0].mxu0
  %v250 = vadd.f32 %v29, %v249
  %v251 = vpop.f32.mrb[0].mxu0
  %252 = vdwg.mxu0
  %253 = vrot.lane.b32.xlu0 %v23, 32
  %v254 = vpop.permute.xlu0 %253
  %v255 = vsel %vm31, %v254, 0
  %257 = vmatprep.subr.mxu0 0.0
  %258 = vmatpush1.msra.mxu0 %v17
  %259 = vmatprep.subr.mxu0 0.0
  %260 = vmatpush1.msra.mxu0 %v18
  %261 = vmatprep.subr.mxu0 0.0
  %262 = vmatpush1.msra.mxu0 %v19
  %263 = vmatprep.subr.mxu0 0.0
  %264 = vmatpush1.msra.mxu0 %v20
  %265 = vmatprep.subr.mxu0 0.0
  %266 = vmatpush1.msra.mxu0 0.0
  %267 = vmatprep.subr.mxu0 0.0
  %268 = vmatpush1.msra.mxu0 0.0
  %269 = vmatprep.subr.mxu0 0.0
  %270 = vmatpush1.msra.mxu0 0.0
  %271 = vmatprep.subr.mxu0 0.0
  %272 = vmatpush1.msra.mxu0 0.0
  %273 = vmatprep.subr.mxu0 0.0
  %274 = vmatpush1.msra.mxu0 0.0
  %275 = vmatprep.subr.mxu0 0.0
  %276 = vmatpush1.msra.mxu0 0.0
  %277 = vmatprep.subr.mxu0 0.0
  %278 = vmatpush1.msra.mxu0 0.0
  %279 = vmatprep.subr.mxu0 0.0
  %280 = vmatpush1.msra.mxu0 0.0
  %281 = vmatprep.subr.mxu0 0.0
  %282 = vmatpush1.msra.mxu0 0.0
  %283 = vmatprep.subr.mxu0 0.0
  %284 = vmatpush1.msra.mxu0 0.0
  %285 = vmatprep.subr.mxu0 0.0
  %286 = vmatpush1.msra.mxu0 0.0
  %287 = vmatprep.subr.mxu0 0.0
  %288 = vmatpush1.msra.mxu0 0.0
  %289 = vmatprep.subr.mxu0 0.0
  %290 = vmatpush1.msra.mxu0 0.0
  %291 = vmatprep.subr.mxu0 0.0
  %292 = vmatpush1.msra.mxu0 0.0
  %293 = vmatprep.subr.mxu0 0.0
  %294 = vmatpush1.msra.mxu0 0.0
  %295 = vmatprep.subr.mxu0 0.0
  %296 = vmatpush1.msra.mxu0 0.0
  %297 = vmatprep.subr.mxu0 0.0
  %298 = vmatpush1.msra.mxu0 0.0
  %299 = vmatprep.subr.mxu0 0.0
  %300 = vmatpush1.msra.mxu0 0.0
  %301 = vmatprep.subr.mxu0 0.0
  %302 = vmatpush1.msra.mxu0 0.0
  %303 = vmatprep.subr.mxu0 0.0
  %304 = vmatpush1.msra.mxu0 0.0
  %305 = vmatprep.subr.mxu0 0.0
  %306 = vmatpush1.msra.mxu0 0.0
  %307 = vmatprep.subr.mxu0 0.0
  %308 = vmatpush1.msra.mxu0 0.0
  %309 = vmatprep.subr.mxu0 0.0
  %310 = vmatpush1.msra.mxu0 0.0
  %311 = vmatprep.subr.mxu0 0.0
  %312 = vmatpush1.msra.mxu0 0.0
  %313 = vmatprep.subr.mxu0 0.0
  %314 = vmatpush1.msra.mxu0 0.0
  %315 = vmatprep.subr.mxu0 0.0
  %316 = vmatpush1.msra.mxu0 0.0
  %317 = vmatprep.subr.mxu0 0.0
  %318 = vmatpush1.msra.mxu0 0.0
  %319 = vmatprep.subr.mxu0 0.0
  %320 = vmatpush1.msra.mxu0 0.0
  %321 = vmatprep.mubr.f32.mxu0 0.0
  %322 = vmatmul.mubr.f32.gmra.mrb[0].mxu0 %v255
  %v323 = vpop.f32.mrb[0].mxu0
  %v324 = vadd.f32 %v29, %v323
  %v325 = vpop.f32.mrb[0].mxu0
  %326 = vdwg.mxu0
  %v328 = vsel %vm31, %v24, 0
  %330 = vmatprep.subr.mxu0 0.0
  %331 = vmatpush1.msra.mxu0 %v17
  %332 = vmatprep.subr.mxu0 0.0
  %333 = vmatpush1.msra.mxu0 %v18
  %334 = vmatprep.subr.mxu0 0.0
  %335 = vmatpush1.msra.mxu0 %v19
  %336 = vmatprep.subr.mxu0 0.0
  %337 = vmatpush1.msra.mxu0 %v20
  %338 = vmatprep.subr.mxu0 0.0
  %339 = vmatpush1.msra.mxu0 0.0
  %340 = vmatprep.subr.mxu0 0.0
  %341 = vmatpush1.msra.mxu0 0.0
  %342 = vmatprep.subr.mxu0 0.0
  %343 = vmatpush1.msra.mxu0 0.0
  %344 = vmatprep.subr.mxu0 0.0
  %345 = vmatpush1.msra.mxu0 0.0
  %346 = vmatprep.subr.mxu0 0.0
  %347 = vmatpush1.msra.mxu0 0.0
  %348 = vmatprep.subr.mxu0 0.0
  %349 = vmatpush1.msra.mxu0 0.0
  %350 = vmatprep.subr.mxu0 0.0
  %351 = vmatpush1.msra.mxu0 0.0
  %352 = vmatprep.subr.mxu0 0.0
  %353 = vmatpush1.msra.mxu0 0.0
  %354 = vmatprep.subr.mxu0 0.0
  %355 = vmatpush1.msra.mxu0 0.0
  %356 = vmatprep.subr.mxu0 0.0
  %357 = vmatpush1.msra.mxu0 0.0
  %358 = vmatprep.subr.mxu0 0.0
  %359 = vmatpush1.msra.mxu0 0.0
  %360 = vmatprep.subr.mxu0 0.0
  %361 = vmatpush1.msra.mxu0 0.0
  %362 = vmatprep.subr.mxu0 0.0
  %363 = vmatpush1.msra.mxu0 0.0
  %364 = vmatprep.subr.mxu0 0.0
  %365 = vmatpush1.msra.mxu0 0.0
  %366 = vmatprep.subr.mxu0 0.0
  %367 = vmatpush1.msra.mxu0 0.0
  %368 = vmatprep.subr.mxu0 0.0
  %369 = vmatpush1.msra.mxu0 0.0
  %370 = vmatprep.subr.mxu0 0.0
  %371 = vmatpush1.msra.mxu0 0.0
  %372 = vmatprep.subr.mxu0 0.0
  %373 = vmatpush1.msra.mxu0 0.0
  %374 = vmatprep.subr.mxu0 0.0
  %375 = vmatpush1.msra.mxu0 0.0
  %376 = vmatprep.subr.mxu0 0.0
  %377 = vmatpush1.msra.mxu0 0.0
  %378 = vmatprep.subr.mxu0 0.0
  %379 = vmatpush1.msra.mxu0 0.0
  %380 = vmatprep.subr.mxu0 0.0
  %381 = vmatpush1.msra.mxu0 0.0
  %382 = vmatprep.subr.mxu0 0.0
  %383 = vmatpush1.msra.mxu0 0.0
  %384 = vmatprep.subr.mxu0 0.0
  %385 = vmatpush1.msra.mxu0 0.0
  %386 = vmatprep.subr.mxu0 0.0
  %387 = vmatpush1.msra.mxu0 0.0
  %388 = vmatprep.subr.mxu0 0.0
  %389 = vmatpush1.msra.mxu0 0.0
  %390 = vmatprep.subr.mxu0 0.0
  %391 = vmatpush1.msra.mxu0 0.0
  %392 = vmatprep.subr.mxu0 0.0
  %393 = vmatpush1.msra.mxu0 0.0
  %394 = vmatprep.mubr.f32.mxu0 0.0
  %395 = vmatmul.mubr.f32.gmra.mrb[0].mxu0 %v328
  %v396 = vpop.f32.mrb[0].mxu0
  %v397 = vadd.f32 %v29, %v396
  %v398 = vpop.f32.mrb[0].mxu0
  %399 = vdwg.mxu0
  %400 = vrot.lane.b32.xlu0 %v24, 96
  %v401 = vpop.permute.xlu0 %400
  %v402 = vsel %vm31, %v401, 0
  %404 = vmatprep.subr.mxu0 0.0
  %405 = vmatpush1.msra.mxu0 %v17
  %406 = vmatprep.subr.mxu0 0.0
  %407 = vmatpush1.msra.mxu0 %v18
  %408 = vmatprep.subr.mxu0 0.0
  %409 = vmatpush1.msra.mxu0 %v19
  %410 = vmatprep.subr.mxu0 0.0
  %411 = vmatpush1.msra.mxu0 %v20
  %412 = vmatprep.subr.mxu0 0.0
  %413 = vmatpush1.msra.mxu0 0.0
  %414 = vmatprep.subr.mxu0 0.0
  %415 = vmatpush1.msra.mxu0 0.0
  %416 = vmatprep.subr.mxu0 0.0
  %417 = vmatpush1.msra.mxu0 0.0
  %418 = vmatprep.subr.mxu0 0.0
  %419 = vmatpush1.msra.mxu0 0.0
  %420 = vmatprep.subr.mxu0 0.0
  %421 = vmatpush1.msra.mxu0 0.0
  %422 = vmatprep.subr.mxu0 0.0
  %423 = vmatpush1.msra.mxu0 0.0
  %424 = vmatprep.subr.mxu0 0.0
  %425 = vmatpush1.msra.mxu0 0.0
  %426 = vmatprep.subr.mxu0 0.0
  %427 = vmatpush1.msra.mxu0 0.0
  %428 = vmatprep.subr.mxu0 0.0
  %429 = vmatpush1.msra.mxu0 0.0
  %430 = vmatprep.subr.mxu0 0.0
  %431 = vmatpush1.msra.mxu0 0.0
  %432 = vmatprep.subr.mxu0 0.0
  %433 = vmatpush1.msra.mxu0 0.0
  %434 = vmatprep.subr.mxu0 0.0
  %435 = vmatpush1.msra.mxu0 0.0
  %436 = vmatprep.subr.mxu0 0.0
  %437 = vmatpush1.msra.mxu0 0.0
  %438 = vmatprep.subr.mxu0 0.0
  %439 = vmatpush1.msra.mxu0 0.0
  %440 = vmatprep.subr.mxu0 0.0
  %441 = vmatpush1.msra.mxu0 0.0
  %442 = vmatprep.subr.mxu0 0.0
  %443 = vmatpush1.msra.mxu0 0.0
  %444 = vmatprep.subr.mxu0 0.0
  %445 = vmatpush1.msra.mxu0 0.0
  %446 = vmatprep.subr.mxu0 0.0
  %447 = vmatpush1.msra.mxu0 0.0
  %448 = vmatprep.subr.mxu0 0.0
  %449 = vmatpush1.msra.mxu0 0.0
  %450 = vmatprep.subr.mxu0 0.0
  %451 = vmatpush1.msra.mxu0 0.0
  %452 = vmatprep.subr.mxu0 0.0
  %453 = vmatpush1.msra.mxu0 0.0
  %454 = vmatprep.subr.mxu0 0.0
  %455 = vmatpush1.msra.mxu0 0.0
  %456 = vmatprep.subr.mxu0 0.0
  %457 = vmatpush1.msra.mxu0 0.0
  %458 = vmatprep.subr.mxu0 0.0
  %459 = vmatpush1.msra.mxu0 0.0
  %460 = vmatprep.subr.mxu0 0.0
  %461 = vmatpush1.msra.mxu0 0.0
  %462 = vmatprep.subr.mxu0 0.0
  %463 = vmatpush1.msra.mxu0 0.0
  %464 = vmatprep.subr.mxu0 0.0
  %465 = vmatpush1.msra.mxu0 0.0
  %466 = vmatprep.subr.mxu0 0.0
  %467 = vmatpush1.msra.mxu0 0.0
  %468 = vmatprep.mubr.f32.mxu0 0.0
  %469 = vmatmul.mubr.f32.gmra.mrb[0].mxu0 %v402
  %v470 = vpop.f32.mrb[0].mxu0
  %v471 = vadd.f32 %v29, %v470
  %v472 = vpop.f32.mrb[0].mxu0
  %473 = vdwg.mxu0
  %474 = vrot.lane.b32.xlu0 %v24, 64
  %v475 = vpop.permute.xlu0 %474
  %v476 = vsel %vm31, %v475, 0
  %478 = vmatprep.subr.mxu0 0.0
  %479 = vmatpush1.msra.mxu0 %v17
  %480 = vmatprep.subr.mxu0 0.0
  %481 = vmatpush1.msra.mxu0 %v18
  %482 = vmatprep.subr.mxu0 0.0
  %483 = vmatpush1.msra.mxu0 %v19
  %484 = vmatprep.subr.mxu0 0.0
  %485 = vmatpush1.msra.mxu0 %v20
  %486 = vmatprep.subr.mxu0 0.0
  %487 = vmatpush1.msra.mxu0 0.0
  %488 = vmatprep.subr.mxu0 0.0
  %489 = vmatpush1.msra.mxu0 0.0
  %490 = vmatprep.subr.mxu0 0.0
  %491 = vmatpush1.msra.mxu0 0.0
  %492 = vmatprep.subr.mxu0 0.0
  %493 = vmatpush1.msra.mxu0 0.0
  %494 = vmatprep.subr.mxu0 0.0
  %495 = vmatpush1.msra.mxu0 0.0
  %496 = vmatprep.subr.mxu0 0.0
  %497 = vmatpush1.msra.mxu0 0.0
  %498 = vmatprep.subr.mxu0 0.0
  %499 = vmatpush1.msra.mxu0 0.0
  %500 = vmatprep.subr.mxu0 0.0
  %501 = vmatpush1.msra.mxu0 0.0
  %502 = vmatprep.subr.mxu0 0.0
  %503 = vmatpush1.msra.mxu0 0.0
  %504 = vmatprep.subr.mxu0 0.0
  %505 = vmatpush1.msra.mxu0 0.0
  %506 = vmatprep.subr.mxu0 0.0
  %507 = vmatpush1.msra.mxu0 0.0
  %508 = vmatprep.subr.mxu0 0.0
  %509 = vmatpush1.msra.mxu0 0.0
  %510 = vmatprep.subr.mxu0 0.0
  %511 = vmatpush1.msra.mxu0 0.0
  %512 = vmatprep.subr.mxu0 0.0
  %513 = vmatpush1.msra.mxu0 0.0
  %514 = vmatprep.subr.mxu0 0.0
  %515 = vmatpush1.msra.mxu0 0.0
  %516 = vmatprep.subr.mxu0 0.0
  %517 = vmatpush1.msra.mxu0 0.0
  %518 = vmatprep.subr.mxu0 0.0
  %519 = vmatpush1.msra.mxu0 0.0
  %520 = vmatprep.subr.mxu0 0.0
  %521 = vmatpush1.msra.mxu0 0.0
  %522 = vmatprep.subr.mxu0 0.0
  %523 = vmatpush1.msra.mxu0 0.0
  %524 = vmatprep.subr.mxu0 0.0
  %525 = vmatpush1.msra.mxu0 0.0
  %526 = vmatprep.subr.mxu0 0.0
  %527 = vmatpush1.msra.mxu0 0.0
  %528 = vmatprep.subr.mxu0 0.0
  %529 = vmatpush1.msra.mxu0 0.0
  %530 = vmatprep.subr.mxu0 0.0
  %531 = vmatpush1.msra.mxu0 0.0
  %532 = vmatprep.subr.mxu0 0.0
  %533 = vmatpush1.msra.mxu0 0.0
  %534 = vmatprep.subr.mxu0 0.0
  %535 = vmatpush1.msra.mxu0 0.0
  %536 = vmatprep.subr.mxu0 0.0
  %537 = vmatpush1.msra.mxu0 0.0
  %538 = vmatprep.subr.mxu0 0.0
  %539 = vmatpush1.msra.mxu0 0.0
  %540 = vmatprep.subr.mxu0 0.0
  %541 = vmatpush1.msra.mxu0 0.0
  %542 = vmatprep.mubr.f32.mxu0 0.0
  %543 = vmatmul.mubr.f32.gmra.mrb[0].mxu0 %v476
  %v544 = vpop.f32.mrb[0].mxu0
  %v545 = vadd.f32 %v29, %v544
  %v546 = vpop.f32.mrb[0].mxu0
  %547 = vdwg.mxu0
  %548 = vrot.lane.b32.xlu0 %v24, 32
  %v549 = vpop.permute.xlu0 %548
  %v550 = vsel %vm31, %v549, 0
  %552 = vmatprep.subr.mxu0 0.0
  %553 = vmatpush1.msra.mxu0 %v17
  %554 = vmatprep.subr.mxu0 0.0
  %555 = vmatpush1.msra.mxu0 %v18
  %556 = vmatprep.subr.mxu0 0.0
  %557 = vmatpush1.msra.mxu0 %v19
  %558 = vmatprep.subr.mxu0 0.0
  %559 = vmatpush1.msra.mxu0 %v20
  %560 = vmatprep.subr.mxu0 0.0
  %561 = vmatpush1.msra.mxu0 0.0
  %562 = vmatprep.subr.mxu0 0.0
  %563 = vmatpush1.msra.mxu0 0.0
  %564 = vmatprep.subr.mxu0 0.0
  %565 = vmatpush1.msra.mxu0 0.0
  %566 = vmatprep.subr.mxu0 0.0
  %567 = vmatpush1.msra.mxu0 0.0
  %568 = vmatprep.subr.mxu0 0.0
  %569 = vmatpush1.msra.mxu0 0.0
  %570 = vmatprep.subr.mxu0 0.0
  %571 = vmatpush1.msra.mxu0 0.0
  %572 = vmatprep.subr.mxu0 0.0
  %573 = vmatpush1.msra.mxu0 0.0
  %574 = vmatprep.subr.mxu0 0.0
  %575 = vmatpush1.msra.mxu0 0.0
  %576 = vmatprep.subr.mxu0 0.0
  %577 = vmatpush1.msra.mxu0 0.0
  %578 = vmatprep.subr.mxu0 0.0
  %579 = vmatpush1.msra.mxu0 0.0
  %580 = vmatprep.subr.mxu0 0.0
  %581 = vmatpush1.msra.mxu0 0.0
  %582 = vmatprep.subr.mxu0 0.0
  %583 = vmatpush1.msra.mxu0 0.0
  %584 = vmatprep.subr.mxu0 0.0
  %585 = vmatpush1.msra.mxu0 0.0
  %586 = vmatprep.subr.mxu0 0.0
  %587 = vmatpush1.msra.mxu0 0.0
  %588 = vmatprep.subr.mxu0 0.0
  %589 = vmatpush1.msra.mxu0 0.0
  %590 = vmatprep.subr.mxu0 0.0
  %591 = vmatpush1.msra.mxu0 0.0
  %592 = vmatprep.subr.mxu0 0.0
  %593 = vmatpush1.msra.mxu0 0.0
  %594 = vmatprep.subr.mxu0 0.0
  %595 = vmatpush1.msra.mxu0 0.0
  %596 = vmatprep.subr.mxu0 0.0
  %597 = vmatpush1.msra.mxu0 0.0
  %598 = vmatprep.subr.mxu0 0.0
  %599 = vmatpush1.msra.mxu0 0.0
  %600 = vmatprep.subr.mxu0 0.0
  %601 = vmatpush1.msra.mxu0 0.0
  %602 = vmatprep.subr.mxu0 0.0
  %603 = vmatpush1.msra.mxu0 0.0
  %604 = vmatprep.subr.mxu0 0.0
  %605 = vmatpush1.msra.mxu0 0.0
  %606 = vmatprep.subr.mxu0 0.0
  %607 = vmatpush1.msra.mxu0 0.0
  %608 = vmatprep.subr.mxu0 0.0
  %609 = vmatpush1.msra.mxu0 0.0
  %610 = vmatprep.subr.mxu0 0.0
  %611 = vmatpush1.msra.mxu0 0.0
  %612 = vmatprep.subr.mxu0 0.0
  %613 = vmatpush1.msra.mxu0 0.0
  %614 = vmatprep.subr.mxu0 0.0
  %615 = vmatpush1.msra.mxu0 0.0
  %616 = vmatprep.mubr.f32.mxu0 0.0
  %617 = vmatmul.mubr.f32.gmra.mrb[0].mxu0 %v550
  %v618 = vpop.f32.mrb[0].mxu0
  %v619 = vadd.f32 %v29, %v618
  %v620 = vpop.f32.mrb[0].mxu0
  %621 = vdwg.mxu0
  %vm622 = vcmask 64512
  %v624 = vsel %vm622, 0.0, 0
  %626 = vmatprep.subr.mxu0 0.0
  %627 = vmatpush1.msra.mxu0 %v21
  %628 = vmatprep.subr.mxu0 0.0
  %629 = vmatpush1.msra.mxu0 0.0
  %630 = vmatprep.subr.mxu0 0.0
  %631 = vmatpush1.msra.mxu0 0.0
  %632 = vmatprep.subr.mxu0 0.0
  %633 = vmatpush1.msra.mxu0 0.0
  %634 = vmatprep.subr.mxu0 0.0
  %635 = vmatpush1.msra.mxu0 0.0
  %636 = vmatprep.subr.mxu0 0.0
  %637 = vmatpush1.msra.mxu0 0.0
  %638 = vmatprep.subr.mxu0 0.0
  %639 = vmatpush1.msra.mxu0 0.0
  %640 = vmatprep.subr.mxu0 0.0
  %641 = vmatpush1.msra.mxu0 0.0
  %642 = vmatprep.subr.mxu0 0.0
  %643 = vmatpush1.msra.mxu0 0.0
  %644 = vmatprep.subr.mxu0 0.0
  %645 = vmatpush1.msra.mxu0 0.0
  %646 = vmatprep.subr.mxu0 0.0
  %647 = vmatpush1.msra.mxu0 0.0
  %648 = vmatprep.subr.mxu0 0.0
  %649 = vmatpush1.msra.mxu0 0.0
  %650 = vmatprep.subr.mxu0 0.0
  %651 = vmatpush1.msra.mxu0 0.0
  %652 = vmatprep.subr.mxu0 0.0
  %653 = vmatpush1.msra.mxu0 0.0
  %654 = vmatprep.subr.mxu0 0.0
  %655 = vmatpush1.msra.mxu0 0.0
  %656 = vmatprep.subr.mxu0 0.0
  %657 = vmatpush1.msra.mxu0 0.0
  %658 = vmatprep.subr.mxu0 0.0
  %659 = vmatpush1.msra.mxu0 0.0
  %660 = vmatprep.subr.mxu0 0.0
  %661 = vmatpush1.msra.mxu0 0.0
  %662 = vmatprep.subr.mxu0 0.0
  %663 = vmatpush1.msra.mxu0 0.0
  %664 = vmatprep.subr.mxu0 0.0
  %665 = vmatpush1.msra.mxu0 0.0
  %666 = vmatprep.subr.mxu0 0.0
  %667 = vmatpush1.msra.mxu0 0.0
  %668 = vmatprep.subr.mxu0 0.0
  %669 = vmatpush1.msra.mxu0 0.0
  %670 = vmatprep.subr.mxu0 0.0
  %671 = vmatpush1.msra.mxu0 0.0
  %672 = vmatprep.subr.mxu0 0.0
  %673 = vmatpush1.msra.mxu0 0.0
  %674 = vmatprep.subr.mxu0 0.0
  %675 = vmatpush1.msra.mxu0 0.0
  %676 = vmatprep.subr.mxu0 0.0
  %677 = vmatpush1.msra.mxu0 0.0
  %678 = vmatprep.subr.mxu0 0.0
  %679 = vmatpush1.msra.mxu0 0.0
  %680 = vmatprep.subr.mxu0 0.0
  %681 = vmatpush1.msra.mxu0 0.0
  %682 = vmatprep.subr.mxu0 0.0
  %683 = vmatpush1.msra.mxu0 0.0
  %684 = vmatprep.subr.mxu0 0.0
  %685 = vmatpush1.msra.mxu0 0.0
  %686 = vmatprep.subr.mxu0 0.0
  %687 = vmatpush1.msra.mxu0 0.0
  %688 = vmatprep.subr.mxu0 0.0
  %689 = vmatpush1.msra.mxu0 0.0
  %690 = vmatprep.mubr.f32.mxu0 0.0
  %691 = vmatmul.mubr.f32.gmra.mrb[0].mxu0 %v624
  %v692 = vpop.f32.mrb[0].mxu0
  %v693 = vadd.f32 0.0, %v692
  %v694 = vpop.f32.mrb[0].mxu0
  %695 = vdwg.mxu0
  %v696 = vadd.f32 %v102, %v693
  %v697 = vxor.u32 %v696, 2147483648
  %v698 = vmul.f32 %v697, 1.442695
  %v699 = vpow.pop %v698
  %v700 = vadd.f32 %v699, 1.0
  %v701 = vrcp.pop %v700
  %v702 = vmul.f32 1.0, %v701
  %v703 = vtanh.pop %v696
  %v704 = vmul.f32 %v702, 0.0
  %706 = vrot.lane.b32.xlu0 %v703, 112
  %v707 = vpop.permute.xlu0 %706
  %v709 = vmul.f32 %v702, %v707
  %711 = vrot.lane.b32.xlu0 %v709, 8
  %v712 = vpop.permute.xlu0 %711
  %v714 = vadd.f32 %v704, %v712
  %v715 = vtanh.pop %v714
  %717 = vrot.lane.b32.xlu0 %v715, 16
  %v718 = vpop.permute.xlu0 %717
  %v720 = vmul.f32 %v702, %v718
  %722 = vrot.lane.b32.xlu0 %v720, 104
  %v723 = vpop.permute.xlu0 %722
  %v724 = vsel %vm622, %v723, 0
  %726 = vmatprep.subr.mxu0 0.0
  %727 = vmatpush1.msra.mxu0 %v21
  %728 = vmatprep.subr.mxu0 0.0
  %729 = vmatpush1.msra.mxu0 0.0
  %730 = vmatprep.subr.mxu0 0.0
  %731 = vmatpush1.msra.mxu0 0.0
  %732 = vmatprep.subr.mxu0 0.0
  %733 = vmatpush1.msra.mxu0 0.0
  %734 = vmatprep.subr.mxu0 0.0
  %735 = vmatpush1.msra.mxu0 0.0
  %736 = vmatprep.subr.mxu0 0.0
  %737 = vmatpush1.msra.mxu0 0.0
  %738 = vmatprep.subr.mxu0 0.0
  %739 = vmatpush1.msra.mxu0 0.0
  %740 = vmatprep.subr.mxu0 0.0
  %741 = vmatpush1.msra.mxu0 0.0
  %742 = vmatprep.subr.mxu0 0.0
  %743 = vmatpush1.msra.mxu0 0.0
  %744 = vmatprep.subr.mxu0 0.0
  %745 = vmatpush1.msra.mxu0 0.0
  %746 = vmatprep.subr.mxu0 0.0
  %747 = vmatpush1.msra.mxu0 0.0
  %748 = vmatprep.subr.mxu0 0.0
  %749 = vmatpush1.msra.mxu0 0.0
  %750 = vmatprep.subr.mxu0 0.0
  %751 = vmatpush1.msra.mxu0 0.0
  %752 = vmatprep.subr.mxu0 0.0
  %753 = vmatpush1.msra.mxu0 0.0
  %754 = vmatprep.subr.mxu0 0.0
  %755 = vmatpush1.msra.mxu0 0.0
  %756 = vmatprep.subr.mxu0 0.0
  %757 = vmatpush1.msra.mxu0 0.0
  %758 = vmatprep.subr.mxu0 0.0
  %759 = vmatpush1.msra.mxu0 0.0
  %760 = vmatprep.subr.mxu0 0.0
  %761 = vmatpush1.msra.mxu0 0.0
  %762 = vmatprep.subr.mxu0 0.0
  %763 = vmatpush1.msra.mxu0 0.0
  %764 = vmatprep.subr.mxu0 0.0
  %765 = vmatpush1.msra.mxu0 0.0
  %766 = vmatprep.subr.mxu0 0.0
  %767 = vmatpush1.msra.mxu0 0.0
  %768 = vmatprep.subr.mxu0 0.0
  %769 = vmatpush1.msra.mxu0 0.0
  %770 = vmatprep.subr.mxu0 0.0
  %771 = vmatpush1.msra.mxu0 0.0
  %772 = vmatprep.subr.mxu0 0.0
  %773 = vmatpush1.msra.mxu0 0.0
  %774 = vmatprep.subr.mxu0 0.0
  %775 = vmatpush1.msra.mxu0 0.0
  %776 = vmatprep.subr.mxu0 0.0
  %777 = vmatpush1.msra.mxu0 0.0
  %778 = vmatprep.subr.mxu0 0.0
  %779 = vmatpush1.msra.mxu0 0.0
  %780 = vmatprep.subr.mxu0 0.0
  %781 = vmatpush1.msra.mxu0 0.0
  %782 = vmatprep.subr.mxu0 0.0
  %783 = vmatpush1.msra.mxu0 0.0
  %784 = vmatprep.subr.mxu0 0.0
  %785 = vmatpush1.msra.mxu0 0.0
  %786 = vmatprep.subr.mxu0 0.0
  %787 = vmatpush1.msra.mxu0 0.0
  %788 = vmatprep.subr.mxu0 0.0
  %789 = vmatpush1.msra.mxu0 0.0
  %790 = vmatprep.mubr.f32.mxu0 0.0
  %791 = vmatmul.mubr.f32.gmra.mrb[0].mxu0 %v724
  %v792 = vpop.f32.mrb[0].mxu0
  %v793 = vadd.f32 0.0, %v792
  %v794 = vpop.f32.mrb[0].mxu0
  %795 = vdwg.mxu0
  %v796 = vadd.f32 %v176, %v793
  %v797 = vxor.u32 %v796, 2147483648
  %v798 = vmul.f32 %v797, 1.442695
  %v799 = vpow.pop %v798
  %v800 = vadd.f32 %v799, 1.0
  %v801 = vrcp.pop %v800
  %v802 = vmul.f32 1.0, %v801
  %v803 = vtanh.pop %v796
  %v804 = vmul.f32 %v802, %v714
  %806 = vrot.lane.b32.xlu0 %v803, 112
  %v807 = vpop.permute.xlu0 %806
  %v809 = vmul.f32 %v802, %v807
  %811 = vrot.lane.b32.xlu0 %v809, 8
  %v812 = vpop.permute.xlu0 %811
  %v814 = vadd.f32 %v804, %v812
  %v815 = vtanh.pop %v814
  %817 = vrot.lane.b32.xlu0 %v815, 16
  %v818 = vpop.permute.xlu0 %817
  %v820 = vmul.f32 %v802, %v818
  %822 = vrot.lane.b32.xlu0 %v820, 104
  %v823 = vpop.permute.xlu0 %822
  %v824 = vsel %vm622, %v823, 0
  %826 = vmatprep.subr.mxu0 0.0
  %827 = vmatpush1.msra.mxu0 %v21
  %828 = vmatprep.subr.mxu0 0.0
  %829 = vmatpush1.msra.mxu0 0.0
  %830 = vmatprep.subr.mxu0 0.0
  %831 = vmatpush1.msra.mxu0 0.0
  %832 = vmatprep.subr.mxu0 0.0
  %833 = vmatpush1.msra.mxu0 0.0
  %834 = vmatprep.subr.mxu0 0.0
  %835 = vmatpush1.msra.mxu0 0.0
  %836 = vmatprep.subr.mxu0 0.0
  %837 = vmatpush1.msra.mxu0 0.0
  %838 = vmatprep.subr.mxu0 0.0
  %839 = vmatpush1.msra.mxu0 0.0
  %840 = vmatprep.subr.mxu0 0.0
  %841 = vmatpush1.msra.mxu0 0.0
  %842 = vmatprep.subr.mxu0 0.0
  %843 = vmatpush1.msra.mxu0 0.0
  %844 = vmatprep.subr.mxu0 0.0
  %845 = vmatpush1.msra.mxu0 0.0
  %846 = vmatprep.subr.mxu0 0.0
  %847 = vmatpush1.msra.mxu0 0.0
  %848 = vmatprep.subr.mxu0 0.0
  %849 = vmatpush1.msra.mxu0 0.0
  %850 = vmatprep.subr.mxu0 0.0
  %851 = vmatpush1.msra.mxu0 0.0
  %852 = vmatprep.subr.mxu0 0.0
  %853 = vmatpush1.msra.mxu0 0.0
  %854 = vmatprep.subr.mxu0 0.0
  %855 = vmatpush1.msra.mxu0 0.0
  %856 = vmatprep.subr.mxu0 0.0
  %857 = vmatpush1.msra.mxu0 0.0
  %858 = vmatprep.subr.mxu0 0.0
  %859 = vmatpush1.msra.mxu0 0.0
  %860 = vmatprep.subr.mxu0 0.0
  %861 = vmatpush1.msra.mxu0 0.0
  %862 = vmatprep.subr.mxu0 0.0
  %863 = vmatpush1.msra.mxu0 0.0
  %864 = vmatprep.subr.mxu0 0.0
  %865 = vmatpush1.msra.mxu0 0.0
  %866 = vmatprep.subr.mxu0 0.0
  %867 = vmatpush1.msra.mxu0 0.0
  %868 = vmatprep.subr.mxu0 0.0
  %869 = vmatpush1.msra.mxu0 0.0
  %870 = vmatprep.subr.mxu0 0.0
  %871 = vmatpush1.msra.mxu0 0.0
  %872 = vmatprep.subr.mxu0 0.0
  %873 = vmatpush1.msra.mxu0 0.0
  %874 = vmatprep.subr.mxu0 0.0
  %875 = vmatpush1.msra.mxu0 0.0
  %876 = vmatprep.subr.mxu0 0.0
  %877 = vmatpush1.msra.mxu0 0.0
  %878 = vmatprep.subr.mxu0 0.0
  %879 = vmatpush1.msra.mxu0 0.0
  %880 = vmatprep.subr.mxu0 0.0
  %881 = vmatpush1.msra.mxu0 0.0
  %882 = vmatprep.subr.mxu0 0.0
  %883 = vmatpush1.msra.mxu0 0.0
  %884 = vmatprep.subr.mxu0 0.0
  %885 = vmatpush1.msra.mxu0 0.0
  %886 = vmatprep.subr.mxu0 0.0
  %887 = vmatpush1.msra.mxu0 0.0
  %888 = vmatprep.subr.mxu0 0.0
  %889 = vmatpush1.msra.mxu0 0.0
  %890 = vmatprep.mubr.f32.mxu0 0.0
  %891 = vmatmul.mubr.f32.gmra.mrb[0].mxu0 %v824
  %v892 = vpop.f32.mrb[0].mxu0
  %v893 = vadd.f32 0.0, %v892
  %v894 = vpop.f32.mrb[0].mxu0
  %895 = vdwg.mxu0
  %v896 = vadd.f32 %v250, %v893
  %v897 = vxor.u32 %v896, 2147483648
  %v898 = vmul.f32 %v897, 1.442695
  %v899 = vpow.pop %v898
  %v900 = vadd.f32 %v899, 1.0
  %v901 = vrcp.pop %v900
  %v902 = vmul.f32 1.0, %v901
  %v903 = vtanh.pop %v896
  %v904 = vmul.f32 %v902, %v814
  %906 = vrot.lane.b32.xlu0 %v903, 112
  %v907 = vpop.permute.xlu0 %906
  %v909 = vmul.f32 %v902, %v907
  %911 = vrot.lane.b32.xlu0 %v909, 8
  %v912 = vpop.permute.xlu0 %911
  %v914 = vadd.f32 %v904, %v912
  %v915 = vtanh.pop %v914
  %917 = vrot.lane.b32.xlu0 %v915, 16
  %v918 = vpop.permute.xlu0 %917
  %v920 = vmul.f32 %v902, %v918
  %922 = vrot.lane.b32.xlu0 %v920, 104
  %v923 = vpop.permute.xlu0 %922
  %v924 = vsel %vm622, %v923, 0
  %926 = vmatprep.subr.mxu0 0.0
  %927 = vmatpush1.msra.mxu0 %v21
  %928 = vmatprep.subr.mxu0 0.0
  %929 = vmatpush1.msra.mxu0 0.0
  %930 = vmatprep.subr.mxu0 0.0
  %931 = vmatpush1.msra.mxu0 0.0
  %932 = vmatprep.subr.mxu0 0.0
  %933 = vmatpush1.msra.mxu0 0.0
  %934 = vmatprep.subr.mxu0 0.0
  %935 = vmatpush1.msra.mxu0 0.0
  %936 = vmatprep.subr.mxu0 0.0
  %937 = vmatpush1.msra.mxu0 0.0
  %938 = vmatprep.subr.mxu0 0.0
  %939 = vmatpush1.msra.mxu0 0.0
  %940 = vmatprep.subr.mxu0 0.0
  %941 = vmatpush1.msra.mxu0 0.0
  %942 = vmatprep.subr.mxu0 0.0
  %943 = vmatpush1.msra.mxu0 0.0
  %944 = vmatprep.subr.mxu0 0.0
  %945 = vmatpush1.msra.mxu0 0.0
  %946 = vmatprep.subr.mxu0 0.0
  %947 = vmatpush1.msra.mxu0 0.0
  %948 = vmatprep.subr.mxu0 0.0
  %949 = vmatpush1.msra.mxu0 0.0
  %950 = vmatprep.subr.mxu0 0.0
  %951 = vmatpush1.msra.mxu0 0.0
  %952 = vmatprep.subr.mxu0 0.0
  %953 = vmatpush1.msra.mxu0 0.0
  %954 = vmatprep.subr.mxu0 0.0
  %955 = vmatpush1.msra.mxu0 0.0
  %956 = vmatprep.subr.mxu0 0.0
  %957 = vmatpush1.msra.mxu0 0.0
  %958 = vmatprep.subr.mxu0 0.0
  %959 = vmatpush1.msra.mxu0 0.0
  %960 = vmatprep.subr.mxu0 0.0
  %961 = vmatpush1.msra.mxu0 0.0
  %962 = vmatprep.subr.mxu0 0.0
  %963 = vmatpush1.msra.mxu0 0.0
  %964 = vmatprep.subr.mxu0 0.0
  %965 = vmatpush1.msra.mxu0 0.0
  %966 = vmatprep.subr.mxu0 0.0
  %967 = vmatpush1.msra.mxu0 0.0
  %968 = vmatprep.subr.mxu0 0.0
  %969 = vmatpush1.msra.mxu0 0.0
  %970 = vmatprep.subr.mxu0 0.0
  %971 = vmatpush1.msra.mxu0 0.0
  %972 = vmatprep.subr.mxu0 0.0
  %973 = vmatpush1.msra.mxu0 0.0
  %974 = vmatprep.subr.mxu0 0.0
  %975 = vmatpush1.msra.mxu0 0.0
  %976 = vmatprep.subr.mxu0 0.0
  %977 = vmatpush1.msra.mxu0 0.0
  %978 = vmatprep.subr.mxu0 0.0
  %979 = vmatpush1.msra.mxu0 0.0
  %980 = vmatprep.subr.mxu0 0.0
  %981 = vmatpush1.msra.mxu0 0.0
  %982 = vmatprep.subr.mxu0 0.0
  %983 = vmatpush1.msra.mxu0 0.0
  %984 = vmatprep.subr.mxu0 0.0
  %985 = vmatpush1.msra.mxu0 0.0
  %986 = vmatprep.subr.mxu0 0.0
  %987 = vmatpush1.msra.mxu0 0.0
  %988 = vmatprep.subr.mxu0 0.0
  %989 = vmatpush1.msra.mxu0 0.0
  %990 = vmatprep.mubr.f32.mxu0 0.0
  %991 = vmatmul.mubr.f32.gmra.mrb[0].mxu0 %v924
  %v992 = vpop.f32.mrb[0].mxu0
  %v993 = vadd.f32 0.0, %v992
  %v994 = vpop.f32.mrb[0].mxu0
  %995 = vdwg.mxu0
  %v996 = vadd.f32 %v324, %v993
  %v997 = vxor.u32 %v996, 2147483648
  %v998 = vmul.f32 %v997, 1.442695
  %v999 = vpow.pop %v998
  %v1000 = vadd.f32 %v999, 1.0
  %v1001 = vrcp.pop %v1000
  %v1002 = vmul.f32 1.0, %v1001
  %v1003 = vtanh.pop %v996
  %v1004 = vmul.f32 %v1002, %v914
  %1006 = vrot.lane.b32.xlu0 %v1003, 112
  %v1007 = vpop.permute.xlu0 %1006
  %v1009 = vmul.f32 %v1002, %v1007
  %1011 = vrot.lane.b32.xlu0 %v1009, 8
  %v1012 = vpop.permute.xlu0 %1011
  %v1014 = vadd.f32 %v1004, %v1012
  %v1015 = vtanh.pop %v1014
  %1017 = vrot.lane.b32.xlu0 %v1015, 16
  %v1018 = vpop.permute.xlu0 %1017
  %v1020 = vmul.f32 %v1002, %v1018
  %1022 = vrot.lane.b32.xlu0 %v1020, 104
  %v1023 = vpop.permute.xlu0 %1022
  %v1024 = vsel %vm622, %v1023, 0
  %1026 = vmatprep.subr.mxu0 0.0
  %1027 = vmatpush1.msra.mxu0 %v21
  %1028 = vmatprep.subr.mxu0 0.0
  %1029 = vmatpush1.msra.mxu0 0.0
  %1030 = vmatprep.subr.mxu0 0.0
  %1031 = vmatpush1.msra.mxu0 0.0
  %1032 = vmatprep.subr.mxu0 0.0
  %1033 = vmatpush1.msra.mxu0 0.0
  %1034 = vmatprep.subr.mxu0 0.0
  %1035 = vmatpush1.msra.mxu0 0.0
  %1036 = vmatprep.subr.mxu0 0.0
  %1037 = vmatpush1.msra.mxu0 0.0
  %1038 = vmatprep.subr.mxu0 0.0
  %1039 = vmatpush1.msra.mxu0 0.0
  %1040 = vmatprep.subr.mxu0 0.0
  %1041 = vmatpush1.msra.mxu0 0.0
  %1042 = vmatprep.subr.mxu0 0.0
  %1043 = vmatpush1.msra.mxu0 0.0
  %1044 = vmatprep.subr.mxu0 0.0
  %1045 = vmatpush1.msra.mxu0 0.0
  %1046 = vmatprep.subr.mxu0 0.0
  %1047 = vmatpush1.msra.mxu0 0.0
  %1048 = vmatprep.subr.mxu0 0.0
  %1049 = vmatpush1.msra.mxu0 0.0
  %1050 = vmatprep.subr.mxu0 0.0
  %1051 = vmatpush1.msra.mxu0 0.0
  %1052 = vmatprep.subr.mxu0 0.0
  %1053 = vmatpush1.msra.mxu0 0.0
  %1054 = vmatprep.subr.mxu0 0.0
  %1055 = vmatpush1.msra.mxu0 0.0
  %1056 = vmatprep.subr.mxu0 0.0
  %1057 = vmatpush1.msra.mxu0 0.0
  %1058 = vmatprep.subr.mxu0 0.0
  %1059 = vmatpush1.msra.mxu0 0.0
  %1060 = vmatprep.subr.mxu0 0.0
  %1061 = vmatpush1.msra.mxu0 0.0
  %1062 = vmatprep.subr.mxu0 0.0
  %1063 = vmatpush1.msra.mxu0 0.0
  %1064 = vmatprep.subr.mxu0 0.0
  %1065 = vmatpush1.msra.mxu0 0.0
  %1066 = vmatprep.subr.mxu0 0.0
  %1067 = vmatpush1.msra.mxu0 0.0
  %1068 = vmatprep.subr.mxu0 0.0
  %1069 = vmatpush1.msra.mxu0 0.0
  %1070 = vmatprep.subr.mxu0 0.0
  %1071 = vmatpush1.msra.mxu0 0.0
  %1072 = vmatprep.subr.mxu0 0.0
  %1073 = vmatpush1.msra.mxu0 0.0
  %1074 = vmatprep.subr.mxu0 0.0
  %1075 = vmatpush1.msra.mxu0 0.0
  %1076 = vmatprep.subr.mxu0 0.0
  %1077 = vmatpush1.msra.mxu0 0.0
  %1078 = vmatprep.subr.mxu0 0.0
  %1079 = vmatpush1.msra.mxu0 0.0
  %1080 = vmatprep.subr.mxu0 0.0
  %1081 = vmatpush1.msra.mxu0 0.0
  %1082 = vmatprep.subr.mxu0 0.0
  %1083 = vmatpush1.msra.mxu0 0.0
  %1084 = vmatprep.subr.mxu0 0.0
  %1085 = vmatpush1.msra.mxu0 0.0
  %1086 = vmatprep.subr.mxu0 0.0
  %1087 = vmatpush1.msra.mxu0 0.0
  %1088 = vmatprep.subr.mxu0 0.0
  %1089 = vmatpush1.msra.mxu0 0.0
  %1090 = vmatprep.mubr.f32.mxu0 0.0
  %1091 = vmatmul.mubr.f32.gmra.mrb[0].mxu0 %v1024
  %v1092 = vpop.f32.mrb[0].mxu0
  %v1093 = vadd.f32 0.0, %v1092
  %v1094 = vpop.f32.mrb[0].mxu0
  %1095 = vdwg.mxu0
  %v1096 = vadd.f32 %v397, %v1093
  %v1097 = vxor.u32 %v1096, 2147483648
  %v1098 = vmul.f32 %v1097, 1.442695
  %v1099 = vpow.pop %v1098
  %v1100 = vadd.f32 %v1099, 1.0
  %v1101 = vrcp.pop %v1100
  %v1102 = vmul.f32 1.0, %v1101
  %v1103 = vtanh.pop %v1096
  %v1104 = vmul.f32 %v1102, %v1014
  %1106 = vrot.lane.b32.xlu0 %v1103, 112
  %v1107 = vpop.permute.xlu0 %1106
  %v1109 = vmul.f32 %v1102, %v1107
  %1111 = vrot.lane.b32.xlu0 %v1109, 8
  %v1112 = vpop.permute.xlu0 %1111
  %v1114 = vadd.f32 %v1104, %v1112
  %v1115 = vtanh.pop %v1114
  %1117 = vrot.lane.b32.xlu0 %v1115, 16
  %v1118 = vpop.permute.xlu0 %1117
  %v1120 = vmul.f32 %v1102, %v1118
  %1122 = vrot.lane.b32.xlu0 %v1120, 104
  %v1123 = vpop.permute.xlu0 %1122
  %v1124 = vsel %vm622, %v1123, 0
  %1126 = vmatprep.subr.mxu0 0.0
  %1127 = vmatpush1.msra.mxu0 %v21
  %1128 = vmatprep.subr.mxu0 0.0
  %1129 = vmatpush1.msra.mxu0 0.0
  %1130 = vmatprep.subr.mxu0 0.0
  %1131 = vmatpush1.msra.mxu0 0.0
  %1132 = vmatprep.subr.mxu0 0.0
  %1133 = vmatpush1.msra.mxu0 0.0
  %1134 = vmatprep.subr.mxu0 0.0
  %1135 = vmatpush1.msra.mxu0 0.0
  %1136 = vmatprep.subr.mxu0 0.0
  %1137 = vmatpush1.msra.mxu0 0.0
  %1138 = vmatprep.subr.mxu0 0.0
  %1139 = vmatpush1.msra.mxu0 0.0
  %1140 = vmatprep.subr.mxu0 0.0
  %1141 = vmatpush1.msra.mxu0 0.0
  %1142 = vmatprep.subr.mxu0 0.0
  %1143 = vmatpush1.msra.mxu0 0.0
  %1144 = vmatprep.subr.mxu0 0.0
  %1145 = vmatpush1.msra.mxu0 0.0
  %1146 = vmatprep.subr.mxu0 0.0
  %1147 = vmatpush1.msra.mxu0 0.0
  %1148 = vmatprep.subr.mxu0 0.0
  %1149 = vmatpush1.msra.mxu0 0.0
  %1150 = vmatprep.subr.mxu0 0.0
  %1151 = vmatpush1.msra.mxu0 0.0
  %1152 = vmatprep.subr.mxu0 0.0
  %1153 = vmatpush1.msra.mxu0 0.0
  %1154 = vmatprep.subr.mxu0 0.0
  %1155 = vmatpush1.msra.mxu0 0.0
  %1156 = vmatprep.subr.mxu0 0.0
  %1157 = vmatpush1.msra.mxu0 0.0
  %1158 = vmatprep.subr.mxu0 0.0
  %1159 = vmatpush1.msra.mxu0 0.0
  %1160 = vmatprep.subr.mxu0 0.0
  %1161 = vmatpush1.msra.mxu0 0.0
  %1162 = vmatprep.subr.mxu0 0.0
  %1163 = vmatpush1.msra.mxu0 0.0
  %1164 = vmatprep.subr.mxu0 0.0
  %1165 = vmatpush1.msra.mxu0 0.0
  %1166 = vmatprep.subr.mxu0 0.0
  %1167 = vmatpush1.msra.mxu0 0.0
  %1168 = vmatprep.subr.mxu0 0.0
  %1169 = vmatpush1.msra.mxu0 0.0
  %1170 = vmatprep.subr.mxu0 0.0
  %1171 = vmatpush1.msra.mxu0 0.0
  %1172 = vmatprep.subr.mxu0 0.0
  %1173 = vmatpush1.msra.mxu0 0.0
  %1174 = vmatprep.subr.mxu0 0.0
  %1175 = vmatpush1.msra.mxu0 0.0
  %1176 = vmatprep.subr.mxu0 0.0
  %1177 = vmatpush1.msra.mxu0 0.0
  %1178 = vmatprep.subr.mxu0 0.0
  %1179 = vmatpush1.msra.mxu0 0.0
  %1180 = vmatprep.subr.mxu0 0.0
  %1181 = vmatpush1.msra.mxu0 0.0
  %1182 = vmatprep.subr.mxu0 0.0
  %1183 = vmatpush1.msra.mxu0 0.0
  %1184 = vmatprep.subr.mxu0 0.0
  %1185 = vmatpush1.msra.mxu0 0.0
  %1186 = vmatprep.subr.mxu0 0.0
  %1187 = vmatpush1.msra.mxu0 0.0
  %1188 = vmatprep.subr.mxu0 0.0
  %1189 = vmatpush1.msra.mxu0 0.0
  %1190 = vmatprep.mubr.f32.mxu0 0.0
  %1191 = vmatmul.mubr.f32.gmra.mrb[0].mxu0 %v1124
  %v1192 = vpop.f32.mrb[0].mxu0
  %v1193 = vadd.f32 0.0, %v1192
  %v1194 = vpop.f32.mrb[0].mxu0
  %1195 = vdwg.mxu0
  %v1196 = vadd.f32 %v471, %v1193
  %v1197 = vxor.u32 %v1196, 2147483648
  %v1198 = vmul.f32 %v1197, 1.442695
  %v1199 = vpow.pop %v1198
  %v1200 = vadd.f32 %v1199, 1.0
  %v1201 = vrcp.pop %v1200
  %v1202 = vmul.f32 1.0, %v1201
  %v1203 = vtanh.pop %v1196
  %v1204 = vmul.f32 %v1202, %v1114
  %1206 = vrot.lane.b32.xlu0 %v1203, 112
  %v1207 = vpop.permute.xlu0 %1206
  %v1209 = vmul.f32 %v1202, %v1207
  %1211 = vrot.lane.b32.xlu0 %v1209, 8
  %v1212 = vpop.permute.xlu0 %1211
  %v1214 = vadd.f32 %v1204, %v1212
  %v1215 = vtanh.pop %v1214
  %1217 = vrot.lane.b32.xlu0 %v1215, 16
  %v1218 = vpop.permute.xlu0 %1217
  %v1220 = vmul.f32 %v1202, %v1218
  %1222 = vrot.lane.b32.xlu0 %v1220, 104
  %v1223 = vpop.permute.xlu0 %1222
  %v1224 = vsel %vm622, %v1223, 0
  %1226 = vmatprep.subr.mxu0 0.0
  %1227 = vmatpush1.msra.mxu0 %v21
  %1228 = vmatprep.subr.mxu0 0.0
  %1229 = vmatpush1.msra.mxu0 0.0
  %1230 = vmatprep.subr.mxu0 0.0
  %1231 = vmatpush1.msra.mxu0 0.0
  %1232 = vmatprep.subr.mxu0 0.0
  %1233 = vmatpush1.msra.mxu0 0.0
  %1234 = vmatprep.subr.mxu0 0.0
  %1235 = vmatpush1.msra.mxu0 0.0
  %1236 = vmatprep.subr.mxu0 0.0
  %1237 = vmatpush1.msra.mxu0 0.0
  %1238 = vmatprep.subr.mxu0 0.0
  %1239 = vmatpush1.msra.mxu0 0.0
  %1240 = vmatprep.subr.mxu0 0.0
  %1241 = vmatpush1.msra.mxu0 0.0
  %1242 = vmatprep.subr.mxu0 0.0
  %1243 = vmatpush1.msra.mxu0 0.0
  %1244 = vmatprep.subr.mxu0 0.0
  %1245 = vmatpush1.msra.mxu0 0.0
  %1246 = vmatprep.subr.mxu0 0.0
  %1247 = vmatpush1.msra.mxu0 0.0
  %1248 = vmatprep.subr.mxu0 0.0
  %1249 = vmatpush1.msra.mxu0 0.0
  %1250 = vmatprep.subr.mxu0 0.0
  %1251 = vmatpush1.msra.mxu0 0.0
  %1252 = vmatprep.subr.mxu0 0.0
  %1253 = vmatpush1.msra.mxu0 0.0
  %1254 = vmatprep.subr.mxu0 0.0
  %1255 = vmatpush1.msra.mxu0 0.0
  %1256 = vmatprep.subr.mxu0 0.0
  %1257 = vmatpush1.msra.mxu0 0.0
  %1258 = vmatprep.subr.mxu0 0.0
  %1259 = vmatpush1.msra.mxu0 0.0
  %1260 = vmatprep.subr.mxu0 0.0
  %1261 = vmatpush1.msra.mxu0 0.0
  %1262 = vmatprep.subr.mxu0 0.0
  %1263 = vmatpush1.msra.mxu0 0.0
  %1264 = vmatprep.subr.mxu0 0.0
  %1265 = vmatpush1.msra.mxu0 0.0
  %1266 = vmatprep.subr.mxu0 0.0
  %1267 = vmatpush1.msra.mxu0 0.0
  %1268 = vmatprep.subr.mxu0 0.0
  %1269 = vmatpush1.msra.mxu0 0.0
  %1270 = vmatprep.subr.mxu0 0.0
  %1271 = vmatpush1.msra.mxu0 0.0
  %1272 = vmatprep.subr.mxu0 0.0
  %1273 = vmatpush1.msra.mxu0 0.0
  %1274 = vmatprep.subr.mxu0 0.0
  %1275 = vmatpush1.msra.mxu0 0.0
  %1276 = vmatprep.subr.mxu0 0.0
  %1277 = vmatpush1.msra.mxu0 0.0
  %1278 = vmatprep.subr.mxu0 0.0
  %1279 = vmatpush1.msra.mxu0 0.0
  %1280 = vmatprep.subr.mxu0 0.0
  %1281 = vmatpush1.msra.mxu0 0.0
  %1282 = vmatprep.subr.mxu0 0.0
  %1283 = vmatpush1.msra.mxu0 0.0
  %1284 = vmatprep.subr.mxu0 0.0
  %1285 = vmatpush1.msra.mxu0 0.0
  %1286 = vmatprep.subr.mxu0 0.0
  %1287 = vmatpush1.msra.mxu0 0.0
  %1288 = vmatprep.subr.mxu0 0.0
  %1289 = vmatpush1.msra.mxu0 0.0
  %1290 = vmatprep.mubr.f32.mxu0 0.0
  %1291 = vmatmul.mubr.f32.gmra.mrb[0].mxu0 %v1224
  %v1292 = vpop.f32.mrb[0].mxu0
  %v1293 = vadd.f32 0.0, %v1292
  %v1294 = vpop.f32.mrb[0].mxu0
  %1295 = vdwg.mxu0
  %v1296 = vadd.f32 %v545, %v1293
  %v1297 = vxor.u32 %v1296, 2147483648
  %v1298 = vmul.f32 %v1297, 1.442695
  %v1299 = vpow.pop %v1298
  %v1300 = vadd.f32 %v1299, 1.0
  %v1301 = vrcp.pop %v1300
  %v1302 = vmul.f32 1.0, %v1301
  %v1303 = vtanh.pop %v1296
  %v1304 = vmul.f32 %v1302, %v1214
  %1306 = vrot.lane.b32.xlu0 %v1303, 112
  %v1307 = vpop.permute.xlu0 %1306
  %v1309 = vmul.f32 %v1302, %v1307
  %1311 = vrot.lane.b32.xlu0 %v1309, 8
  %v1312 = vpop.permute.xlu0 %1311
  %v1314 = vadd.f32 %v1304, %v1312
  %v1315 = vtanh.pop %v1314
  %1317 = vrot.lane.b32.xlu0 %v1315, 16
  %v1318 = vpop.permute.xlu0 %1317
  %v1320 = vmul.f32 %v1302, %v1318
  %1322 = vrot.lane.b32.xlu0 %v1320, 104
  %v1323 = vpop.permute.xlu0 %1322
  %v1324 = vsel %vm622, %v1323, 0
  %1326 = vmatprep.subr.mxu0 0.0
  %1327 = vmatpush1.msra.mxu0 %v21
  %1328 = vmatprep.subr.mxu0 0.0
  %1329 = vmatpush1.msra.mxu0 0.0
  %1330 = vmatprep.subr.mxu0 0.0
  %1331 = vmatpush1.msra.mxu0 0.0
  %1332 = vmatprep.subr.mxu0 0.0
  %1333 = vmatpush1.msra.mxu0 0.0
  %1334 = vmatprep.subr.mxu0 0.0
  %1335 = vmatpush1.msra.mxu0 0.0
  %1336 = vmatprep.subr.mxu0 0.0
  %1337 = vmatpush1.msra.mxu0 0.0
  %1338 = vmatprep.subr.mxu0 0.0
  %1339 = vmatpush1.msra.mxu0 0.0
  %1340 = vmatprep.subr.mxu0 0.0
  %1341 = vmatpush1.msra.mxu0 0.0
  %1342 = vmatprep.subr.mxu0 0.0
  %1343 = vmatpush1.msra.mxu0 0.0
  %1344 = vmatprep.subr.mxu0 0.0
  %1345 = vmatpush1.msra.mxu0 0.0
  %1346 = vmatprep.subr.mxu0 0.0
  %1347 = vmatpush1.msra.mxu0 0.0
  %1348 = vmatprep.subr.mxu0 0.0
  %1349 = vmatpush1.msra.mxu0 0.0
  %1350 = vmatprep.subr.mxu0 0.0
  %1351 = vmatpush1.msra.mxu0 0.0
  %1352 = vmatprep.subr.mxu0 0.0
  %1353 = vmatpush1.msra.mxu0 0.0
  %1354 = vmatprep.subr.mxu0 0.0
  %1355 = vmatpush1.msra.mxu0 0.0
  %1356 = vmatprep.subr.mxu0 0.0
  %1357 = vmatpush1.msra.mxu0 0.0
  %1358 = vmatprep.subr.mxu0 0.0
  %1359 = vmatpush1.msra.mxu0 0.0
  %1360 = vmatprep.subr.mxu0 0.0
  %1361 = vmatpush1.msra.mxu0 0.0
  %1362 = vmatprep.subr.mxu0 0.0
  %1363 = vmatpush1.msra.mxu0 0.0
  %1364 = vmatprep.subr.mxu0 0.0
  %1365 = vmatpush1.msra.mxu0 0.0
  %1366 = vmatprep.subr.mxu0 0.0
  %1367 = vmatpush1.msra.mxu0 0.0
  %1368 = vmatprep.subr.mxu0 0.0
  %1369 = vmatpush1.msra.mxu0 0.0
  %1370 = vmatprep.subr.mxu0 0.0
  %1371 = vmatpush1.msra.mxu0 0.0
  %1372 = vmatprep.subr.mxu0 0.0
  %1373 = vmatpush1.msra.mxu0 0.0
  %1374 = vmatprep.subr.mxu0 0.0
  %1375 = vmatpush1.msra.mxu0 0.0
  %1376 = vmatprep.subr.mxu0 0.0
  %1377 = vmatpush1.msra.mxu0 0.0
  %1378 = vmatprep.subr.mxu0 0.0
  %1379 = vmatpush1.msra.mxu0 0.0
  %1380 = vmatprep.subr.mxu0 0.0
  %1381 = vmatpush1.msra.mxu0 0.0
  %1382 = vmatprep.subr.mxu0 0.0
  %1383 = vmatpush1.msra.mxu0 0.0
  %1384 = vmatprep.subr.mxu0 0.0
  %1385 = vmatpush1.msra.mxu0 0.0
  %1386 = vmatprep.subr.mxu0 0.0
  %1387 = vmatpush1.msra.mxu0 0.0
  %1388 = vmatprep.subr.mxu0 0.0
  %1389 = vmatpush1.msra.mxu0 0.0
  %1390 = vmatprep.mubr.f32.mxu0 0.0
  %1391 = vmatmul.mubr.f32.gmra.mrb[0].mxu0 %v1324
  %v1392 = vpop.f32.mrb[0].mxu0
  %v1393 = vadd.f32 0.0, %v1392
  %v1394 = vpop.f32.mrb[0].mxu0
  %1395 = vdwg.mxu0
  %v1396 = vadd.f32 %v619, %v1393
  %v1397 = vxor.u32 %v1396, 2147483648
  %v1398 = vmul.f32 %v1397, 1.442695
  %v1399 = vpow.pop %v1398
  %v1400 = vadd.f32 %v1399, 1.0
  %v1401 = vrcp.pop %v1400
  %v1402 = vmul.f32 1.0, %v1401
  %v1403 = vtanh.pop %v1396
  %v1404 = vmul.f32 %v1402, %v1314
  %1406 = vrot.lane.b32.xlu0 %v1403, 112
  %v1407 = vpop.permute.xlu0 %1406
  %v1409 = vmul.f32 %v1402, %v1407
  %1411 = vrot.lane.b32.xlu0 %v1409, 8
  %v1412 = vpop.permute.xlu0 %1411
  %v1414 = vadd.f32 %v1404, %v1412
  %v1415 = vtanh.pop %v1414
  %1417 = vrot.lane.b32.xlu0 %v1415, 16
  %v1418 = vpop.permute.xlu0 %1417
  %v1420 = vmul.f32 %v1402, %v1418
  %1422 = vrot.lane.b32.xlu0 %v820, 112
  %v1423 = vpop.permute.xlu0 %1422
  %1425 = vrot.lane.b32.xlu0 %v920, 120
  %v1426 = vpop.permute.xlu0 %1425
  %1428 = vrot.lane.b32.xlu0 %v1120, 8
  %v1429 = vpop.permute.xlu0 %1428
  %1431 = vrot.lane.b32.xlu0 %v1220, 16
  %v1432 = vpop.permute.xlu0 %1431
  %1434 = vrot.lane.b32.xlu0 %v1320, 24
  %v1435 = vpop.permute.xlu0 %1434
  %1438 = vrot.lane.b32.xlu0 %v1420, 32
  %v1439 = vpop.permute.xlu0 %1438
  %v1441 = vsel %vm622, %v723, %v1423
  %vm1442 = vcmask 130048
  %v1443 = vsel %vm1442, %v1441, %v1426
  %vm1444 = vcmask 195584
  %v1445 = vsel %vm1444, %v1443, %v1020
  %v1446 = vsel %vm31, %v1445, %v1429
  %vm1447 = vcmask 326656
  %v1448 = vsel %vm1447, %v1446, %v1432
  %vm1449 = vcmask 392192
  %v1450 = vsel %vm1449, %v1448, %v1435
  %vm1451 = vcmask 457728
  %v1452 = vsel %vm1451, %v1450, %v1439
  %vm1453 = vcmask 523264
  %1454 = vst.msk [vmem:[%s4] sm:$0xff] %vm1453, %v1452
  // Predicated region
  $region18: #{lstm_forward.1} parent=0 // pred_check
    _
  $region19: #{lstm_forward.1} parent=0 // pred_check_branch
    %1456 = sbr.rel (0) target = $region21
  $region20: #{lstm_forward.1} parent=0 // pred_region
    _
  $region21: #{lstm_forward.1} parent=0 // pred_fallthru
    _
  // Predicated region
  $region22: #{lstm_forward.1} parent=0 // pred_check
    _
  $region23: #{lstm_forward.1} parent=0 // pred_check_branch
    %1458 = sbr.rel (0) target = $region25
  $region24: #{lstm_forward.1} parent=0 // pred_region
    _
  $region25: #{lstm_forward.1} parent=0 // pred_fallthru
    _

</llo_original>
